<compile_context>
chip_gen: v5e
topology: v5e:2x2
jax: 0.10.0
libtpu: 0.0.40
codegen_flags: <defaults>
</compile_context>

<pallas_src>
import jax
import jax.numpy as jnp
from jax.experimental import pallas as pl
from jax.experimental.pallas import tpu as pltpu


_SUB = 16     # sublane alignment (16 keeps bf16-packed blocks legal)
_LANE = 128   # lane alignment


def _round_up(x, m):
    return (x + m - 1) // m * m


def _largest_divisor_leq(n, cap):
    for d in range(min(n, cap), 0, -1):
        if n % d == 0:
            return d
    return 1


def _pad_gate_blocks(w, h, h_pad):
    """Pad each of the 4 stacked gate blocks (rows) of `w` from h to h_pad."""
    parts = []
    for k in range(4):
        blk = w[k * h:(k + 1) * h]
        pad_cfg = [(0, h_pad - h)] + [(0, 0)] * (blk.ndim - 1)
        parts.append(jnp.pad(blk, pad_cfg))
    return jnp.concatenate(parts, axis=0)


def _lstm_kernel(gx_ref, whh_hbm_ref, h_out_ref, c_out_ref,
                 whh_vmem, h_sc, c_sc):
    tc = pl.program_id(1)

    @pl.when(tc == 0)
    def _init():
        # One-shot weight load into a single-buffered VMEM scratch buffer
        # (constant-index operand: avoid the default double-buffering).
        pltpu.sync_copy(whh_hbm_ref, whh_vmem)
        h_sc[...] = jnp.zeros_like(h_sc)
        c_sc[...] = jnp.zeros_like(c_sc)

    hp = h_sc.shape[1]
    t_chunk = gx_ref.shape[0]
    whh = whh_vmem[...]                               # (Hp, 4Hp) bf16, resident

    def step(t, carry):
        h, c = carry
        # x @ W_ih^T + bias was hoisted; only the recurrent matmul remains on
        # the serial critical path.  bf16 MXU inputs, f32 accumulation.
        gx = gx_ref[t].astype(jnp.float32)            # (B_BLK, 4Hp)
        gates = gx + jnp.dot(h.astype(jnp.bfloat16), whh,
                             preferred_element_type=jnp.float32)
        i_g = jax.nn.sigmoid(gates[:, 0 * hp:1 * hp])     # lane-aligned slices
        f_g = jax.nn.sigmoid(gates[:, 1 * hp:2 * hp])
        g_g = jnp.tanh(gates[:, 2 * hp:3 * hp])
        o_g = jax.nn.sigmoid(gates[:, 3 * hp:4 * hp])
        c_new = f_g * c + i_g * g_g
        h_new = o_g * jnp.tanh(c_new)
        return h_new, c_new

    h_fin, c_fin = jax.lax.fori_loop(0, t_chunk, step,
                                     (h_sc[...], c_sc[...]), unroll=True)
    h_sc[...] = h_fin
    c_sc[...] = c_fin

    @pl.when(tc == pl.num_programs(1) - 1)
    def _finalize():
        h_out_ref[...] = h_fin
        c_out_ref[...] = c_fin


def encoder_forward(tokens, params):
    """tokens: (B, T) int32.  Returns (h, c), each (1, B, H) — PyTorch LSTM."""
    embed_w = params["embed_w"]          # (V, E), row 0 zeroed (padding_idx=0)
    w_ih = params["w_ih"]                # (4H, E)
    w_hh = params["w_hh"]                # (4H, H)
    b = params["b_ih"] + params["b_hh"]  # (4H,)

    B, T = tokens.shape
    E = embed_w.shape[1]
    H = w_hh.shape[1]

    H_pad = _round_up(H, _LANE)
    B_pad = _round_up(B, _SUB)
    B_BLK = B_pad
    for cand in (256, 128, 64, 32, 16):
        if B_pad % cand == 0:
            B_BLK = cand
            break
    T_CHUNK = _largest_divisor_leq(T, 32)

    # Zero-pad each gate block so gate slices are lane-aligned multiples of
    # 128; zero padding keeps padded lanes inert (gates=0 -> c,h stay 0).
    w_ih_p = _pad_gate_blocks(w_ih, H, H_pad)                      # (4Hp, E)
    w_hh_p = _pad_gate_blocks(w_hh, H, H_pad)                      # (4Hp, H)
    w_hh_p = jnp.pad(w_hh_p, ((0, 0), (0, H_pad - H)))             # (4Hp, Hp)
    b_p = _pad_gate_blocks(b[:, None], H, H_pad)[:, 0]             # (4Hp,)

    # Pad batch with padding tokens (id 0 -> zero embedding row); padded rows
    # are independent and sliced off at the end.
    tokens_p = jnp.pad(tokens, ((0, B_pad - B), (0, 0)))

    # Glue: time-major gather (only the int32 token matrix is transposed) and
    # ONE big bf16 GEMM over all timesteps with the bias folded in.
    x_tm = jnp.take(embed_w, tokens_p.T, axis=0)                   # (T, Bp, E)
    gates_x = jnp.dot(x_tm.reshape(T * B_pad, E).astype(jnp.bfloat16),
                      w_ih_p.T.astype(jnp.bfloat16),
                      preferred_element_type=jnp.float32)
    gates_x = gates_x + b_p[None, :].astype(jnp.float32)
    gates_x = gates_x.reshape(T, B_pad, 4 * H_pad).astype(jnp.bfloat16)

    whh_t = w_hh_p.T.astype(jnp.bfloat16)                          # (Hp, 4Hp)

    n_b = B_pad // B_BLK
    n_t = T // T_CHUNK

    # Raise scoped-VMEM limit only when the resident working set needs it.
    vmem_need = (2 * T_CHUNK * B_BLK * 4 * H_pad * 2   # dbl-buffered gates bf16
                 + H_pad * 4 * H_pad * 2               # resident W_hh bf16
                 + 6 * B_BLK * H_pad * 4)              # h/c scratch + outputs
    cp_kwargs = dict(dimension_semantics=("parallel", "arbitrary"))
    if vmem_need * 2 > (16 << 20):
        cp_kwargs["vmem_limit_bytes"] = min(int(vmem_need * 2), 100 << 20)

    h_last, c_last = pl.pallas_call(
        _lstm_kernel,
        out_shape=(jax.ShapeDtypeStruct((B_pad, H_pad), jnp.float32),
                   jax.ShapeDtypeStruct((B_pad, H_pad), jnp.float32)),
        grid_spec=pltpu.PrefetchScalarGridSpec(
            num_scalar_prefetch=0,
            grid=(n_b, n_t),
            in_specs=[
                pl.BlockSpec((T_CHUNK, B_BLK, 4 * H_pad),
                             lambda b_i, t_i: (t_i, b_i, 0)),
                pl.BlockSpec(memory_space=pl.ANY),     # W_hh: stays in HBM
            ],
            out_specs=[
                pl.BlockSpec((B_BLK, H_pad), lambda b_i, t_i: (b_i, 0)),
                pl.BlockSpec((B_BLK, H_pad), lambda b_i, t_i: (b_i, 0)),
            ],
            scratch_shapes=[
                pltpu.VMEM((H_pad, 4 * H_pad), jnp.bfloat16),  # resident W_hh
                pltpu.VMEM((B_BLK, H_pad), jnp.float32),       # h carry
                pltpu.VMEM((B_BLK, H_pad), jnp.float32),       # c carry
            ],
        ),
        compiler_params=pltpu.CompilerParams(**cp_kwargs),
    )(gates_x, whh_t)

    # Slice away batch/hidden padding; PyTorch returns (num_layers, B, H).
    h = h_last[:B, :H][None, ...]
    c = c_last[:B, :H][None, ...]
    return h, c


def init_params(key, vocab_size, embed_dim, hidden_dim):
    k1, k2, k3, k4, k5 = jax.random.split(key, 5)
    embed_w = jax.random.normal(k1, (vocab_size, embed_dim), jnp.float32) * 0.1
    embed_w = embed_w.at[0].set(0.0)     # padding_idx=0 -> zero row
    w_ih = jax.random.normal(k2, (4 * hidden_dim, embed_dim), jnp.float32) * 0.1
    w_hh = jax.random.normal(k3, (4 * hidden_dim, hidden_dim), jnp.float32) * 0.1
    b_ih = jax.random.normal(k4, (4 * hidden_dim,), jnp.float32) * 0.1
    b_hh = jax.random.normal(k5, (4 * hidden_dim,), jnp.float32) * 0.1
    return dict(embed_w=embed_w, w_ih=w_ih, w_hh=w_hh, b_ih=b_ih, b_hh=b_hh)


def _reference_forward(tokens, params):
    """Pure-JAX f32 reference of the same PyTorch semantics."""
    embed_w, w_ih, w_hh = params["embed_w"], params["w_ih"], params["w_hh"]
    b = params["b_ih"] + params["b_hh"]
    B, T = tokens.shape
    H = w_hh.shape[1]
    x = jnp.take(embed_w, tokens, axis=0)            # (B, T, E)
    h = jnp.zeros((B, H), jnp.float32)
    c = jnp.zeros((B, H), jnp.float32)
    for t in range(T):
        g = x[:, t, :] @ w_ih.T + h @ w_hh.T + b
        i = jax.nn.sigmoid(g[:, 0 * H:1 * H])
        f = jax.nn.sigmoid(g[:, 1 * H:2 * H])
        gg = jnp.tanh(g[:, 2 * H:3 * H])
        o = jax.nn.sigmoid(g[:, 3 * H:4 * H])
        c = f * c + i * gg
        h = o * jnp.tanh(c)
    return h[None], c[None]


if __name__ == "__main__":
    vocab_size, embed_dim, hidden_dim = 16, 32, 32
    B, T = 2, 8

    key = jax.random.PRNGKey(0)
    k_tok, k_par = jax.random.split(key)
    params = init_params(k_par, vocab_size, embed_dim, hidden_dim)
    tokens = jax.random.randint(k_tok, (B, T), 0, vocab_size, dtype=jnp.int32)

    h, c = encoder_forward(tokens, params)
    jax.block_until_ready((h, c))

    h_ref, c_ref = _reference_forward(tokens, params)
    assert h.shape == (1, B, hidden_dim) and c.shape == (1, B, hidden_dim)
    # bf16 MXU inputs (f32 accumulation) -> loosened tolerance vs f32 reference.
    assert jnp.allclose(h, h_ref, atol=2e-2, rtol=2e-2), "h mismatch vs reference"
    assert jnp.allclose(c, c_ref, atol=2e-2, rtol=2e-2), "c mismatch vs reference"

    print("KERNEL_OK")
</pallas_src>

<mosaic_0001>
module attributes {stable_mosaic.version = 11 : i64} {
  func.func @_lstm_kernel(%arg0: i32, %arg1: i32, %arg2: memref<8x16x512xbf16, #tpu.memory_space<vmem>>, %arg3: memref<128x512xbf16, #tpu.memory_space<any>>, %arg4: memref<16x128xf32, #tpu.memory_space<vmem>>, %arg5: memref<16x128xf32, #tpu.memory_space<vmem>>, %arg6: memref<128x512xbf16, #tpu.memory_space<vmem>>, %arg7: memref<16x128xf32, #tpu.memory_space<vmem>>, %arg8: memref<16x128xf32, #tpu.memory_space<vmem>>) attributes {dimension_semantics = [#tpu.dimension_semantics<parallel>, #tpu.dimension_semantics<arbitrary>], iteration_bounds = array<i64: 1, 1>, scalar_prefetch = 0 : i64, scratch_operands = 3 : i64, tpu.core_type = #tpu.core_type<tc>, window_params = [{transform_indices = @transform_0, window_bounds = array<i64: 8, 16, 512>}, {}, {transform_indices = @transform_2, window_bounds = array<i64: 16, 128>}, {transform_indices = @transform_3, window_bounds = array<i64: 16, 128>}]} {
    %c0_i32 = arith.constant 0 : i32
    %0 = arith.cmpi eq, %arg1, %c0_i32 : i32
    %1 = arith.extui %0 : i1 to i32
    %c0_i32_0 = arith.constant 0 : i32
    %2 = arith.cmpi ne, %1, %c0_i32_0 : i32
    scf.if %2 {
      "tpu.region"() ({
        %271 = tpu.sem_alloc : memref<!tpu.dma_semaphore, #tpu.memory_space<semaphore_mem>>
        tpu.enqueue_dma source(%arg3 : memref<128x512xbf16, #tpu.memory_space<any>>) target(%arg6 : memref<128x512xbf16, #tpu.memory_space<vmem>>) target_semaphore(%271 : memref<!tpu.dma_semaphore, #tpu.memory_space<semaphore_mem>>)
        tpu.wait_dma2 semaphore(%271 : memref<!tpu.dma_semaphore, #tpu.memory_space<semaphore_mem>>) src(%arg3 : memref<128x512xbf16, #tpu.memory_space<any>>) dst(%arg6 : memref<128x512xbf16, #tpu.memory_space<vmem>>)
        tpu.yield
      }) : () -> ()
      %cst_60 = arith.constant 0.000000e+00 : f32
      %267 = vector.broadcast %cst_60 : f32 to vector<16x128xf32>
      %c0_61 = arith.constant 0 : index
      %c0_62 = arith.constant 0 : index
      %268 = vector.load %arg7[%c0_61, %c0_62] : memref<16x128xf32, #tpu.memory_space<vmem>>, vector<16x128xf32>
      tpu.vector_store %arg7[%c0_61, %c0_62], %267 {strides = array<i32>} : memref<16x128xf32, #tpu.memory_space<vmem>>, vector<16x128xf32>,
      %cst_63 = arith.constant 0.000000e+00 : f32
      %269 = vector.broadcast %cst_63 : f32 to vector<16x128xf32>
      %c0_64 = arith.constant 0 : index
      %c0_65 = arith.constant 0 : index
      %270 = vector.load %arg8[%c0_64, %c0_65] : memref<16x128xf32, #tpu.memory_space<vmem>>, vector<16x128xf32>
      tpu.vector_store %arg8[%c0_64, %c0_65], %269 {strides = array<i32>} : memref<16x128xf32, #tpu.memory_space<vmem>>, vector<16x128xf32>,
    } else {
    }
    %c0 = arith.constant 0 : index
    %c0_1 = arith.constant 0 : index
    %3 = vector.load %arg6[%c0, %c0_1] : memref<128x512xbf16, #tpu.memory_space<vmem>>, vector<128x512xbf16>
    %c0_2 = arith.constant 0 : index
    %c0_3 = arith.constant 0 : index
    %4 = vector.load %arg7[%c0_2, %c0_3] : memref<16x128xf32, #tpu.memory_space<vmem>>, vector<16x128xf32>
    %c0_4 = arith.constant 0 : index
    %c0_5 = arith.constant 0 : index
    %5 = vector.load %arg8[%c0_4, %c0_5] : memref<16x128xf32, #tpu.memory_space<vmem>>, vector<16x128xf32>
    %c0_i32_6 = arith.constant 0 : i32
    %6 = arith.index_cast %c0_i32_6 : i32 to index
    %c0_7 = arith.constant 0 : index
    %c0_8 = arith.constant 0 : index
    %7 = vector.load %arg2[%6, %c0_7, %c0_8] : memref<8x16x512xbf16, #tpu.memory_space<vmem>>, vector<1x16x512xbf16>
    %8 = vector.shape_cast %7 : vector<1x16x512xbf16> to vector<16x512xbf16>
    %9 = arith.extf %8 : vector<16x512xbf16> to vector<16x512xf32>
    %10 = arith.truncf %4 : vector<16x128xf32> to vector<16x128xbf16>
    %cst = arith.constant dense<0.000000e+00> : vector<16x512xf32>
    %11 = tpu.matmul %10, %3, %cst {dimension_numbers = #tpu.dot_dimension_numbers<[1], [0], [0], [1], [0, 0, 1, 1], [], []>} : vector<16x128xbf16>, vector<128x512xbf16>, vector<16x512xf32> -> vector<16x512xf32>
    %12 = arith.addf %9, %11 : vector<16x512xf32>
    %13 = vector.extract_strided_slice %12 {offsets = [0, 0], sizes = [16, 128], strides = [1, 1]} : vector<16x512xf32> to vector<16x128xf32>
    %14 = arith.negf %13 : vector<16x128xf32>
    %15 = math.exp %14 : vector<16x128xf32>
    %cst_9 = arith.constant 1.000000e+00 : f32
    %16 = vector.broadcast %cst_9 : f32 to vector<16x128xf32>
    %17 = arith.addf %16, %15 : vector<16x128xf32>
    %18 = arith.divf %16, %17 : vector<16x128xf32>
    %19 = vector.extract_strided_slice %12 {offsets = [0, 128], sizes = [16, 128], strides = [1, 1]} : vector<16x512xf32> to vector<16x128xf32>
    %20 = arith.negf %19 : vector<16x128xf32>
    %21 = math.exp %20 : vector<16x128xf32>
    %cst_10 = arith.constant 1.000000e+00 : f32
    %22 = vector.broadcast %cst_10 : f32 to vector<16x128xf32>
    %23 = arith.addf %22, %21 : vector<16x128xf32>
    %24 = arith.divf %22, %23 : vector<16x128xf32>
    %25 = vector.extract_strided_slice %12 {offsets = [0, 256], sizes = [16, 128], strides = [1, 1]} : vector<16x512xf32> to vector<16x128xf32>
    %26 = math.tanh %25 : vector<16x128xf32>
    %27 = vector.extract_strided_slice %12 {offsets = [0, 384], sizes = [16, 128], strides = [1, 1]} : vector<16x512xf32> to vector<16x128xf32>
    %28 = arith.negf %27 : vector<16x128xf32>
    %29 = math.exp %28 : vector<16x128xf32>
    %cst_11 = arith.constant 1.000000e+00 : f32
    %30 = vector.broadcast %cst_11 : f32 to vector<16x128xf32>
    %31 = arith.addf %30, %29 : vector<16x128xf32>
    %32 = arith.divf %30, %31 : vector<16x128xf32>
    %33 = arith.mulf %24, %5 : vector<16x128xf32>
    %34 = arith.mulf %18, %26 : vector<16x128xf32>
    %35 = arith.addf %33, %34 : vector<16x128xf32>
    %36 = math.tanh %35 : vector<16x128xf32>
    %37 = arith.mulf %32, %36 : vector<16x128xf32>
    %c1_i32 = arith.constant 1 : i32
    %38 = arith.index_cast %c1_i32 : i32 to index
    %c0_12 = arith.constant 0 : index
    %c0_13 = arith.constant 0 : index
    %39 = vector.load %arg2[%38, %c0_12, %c0_13] : memref<8x16x512xbf16, #tpu.memory_space<vmem>>, vector<1x16x512xbf16>
    %40 = vector.shape_cast %39 : vector<1x16x512xbf16> to vector<16x512xbf16>
    %41 = arith.extf %40 : vector<16x512xbf16> to vector<16x512xf32>
    %42 = arith.truncf %37 : vector<16x128xf32> to vector<16x128xbf16>
    %cst_14 = arith.constant dense<0.000000e+00> : vector<16x512xf32>
    %43 = tpu.matmul %42, %3, %cst_14 {dimension_numbers = #tpu.dot_dimension_numbers<[1], [0], [0], [1], [0, 0, 1, 1], [], []>} : vector<16x128xbf16>, vector<128x512xbf16>, vector<16x512xf32> -> vector<16x512xf32>
    %44 = arith.addf %41, %43 : vector<16x512xf32>
    %45 = vector.extract_strided_slice %44 {offsets = [0, 0], sizes = [16, 128], strides = [1, 1]} : vector<16x512xf32> to vector<16x128xf32>
    %46 = arith.negf %45 : vector<16x128xf32>
    %47 = math.exp %46 : vector<16x128xf32>
    %cst_15 = arith.constant 1.000000e+00 : f32
    %48 = vector.broadcast %cst_15 : f32 to vector<16x128xf32>
    %49 = arith.addf %48, %47 : vector<16x128xf32>
    %50 = arith.divf %48, %49 : vector<16x128xf32>
    %51 = vector.extract_strided_slice %44 {offsets = [0, 128], sizes = [16, 128], strides = [1, 1]} : vector<16x512xf32> to vector<16x128xf32>
    %52 = arith.negf %51 : vector<16x128xf32>
    %53 = math.exp %52 : vector<16x128xf32>
    %cst_16 = arith.constant 1.000000e+00 : f32
    %54 = vector.broadcast %cst_16 : f32 to vector<16x128xf32>
    %55 = arith.addf %54, %53 : vector<16x128xf32>
    %56 = arith.divf %54, %55 : vector<16x128xf32>
    %57 = vector.extract_strided_slice %44 {offsets = [0, 256], sizes = [16, 128], strides = [1, 1]} : vector<16x512xf32> to vector<16x128xf32>
    %58 = math.tanh %57 : vector<16x128xf32>
    %59 = vector.extract_strided_slice %44 {offsets = [0, 384], sizes = [16, 128], strides = [1, 1]} : vector<16x512xf32> to vector<16x128xf32>
    %60 = arith.negf %59 : vector<16x128xf32>
    %61 = math.exp %60 : vector<16x128xf32>
    %cst_17 = arith.constant 1.000000e+00 : f32
    %62 = vector.broadcast %cst_17 : f32 to vector<16x128xf32>
    %63 = arith.addf %62, %61 : vector<16x128xf32>
    %64 = arith.divf %62, %63 : vector<16x128xf32>
    %65 = arith.mulf %56, %35 : vector<16x128xf32>
    %66 = arith.mulf %50, %58 : vector<16x128xf32>
    %67 = arith.addf %65, %66 : vector<16x128xf32>
    %68 = math.tanh %67 : vector<16x128xf32>
    %69 = arith.mulf %64, %68 : vector<16x128xf32>
    %c2_i32 = arith.constant 2 : i32
    %70 = arith.index_cast %c2_i32 : i32 to index
    %c0_18 = arith.constant 0 : index
    %c0_19 = arith.constant 0 : index
    %71 = vector.load %arg2[%70, %c0_18, %c0_19] : memref<8x16x512xbf16, #tpu.memory_space<vmem>>, vector<1x16x512xbf16>
    %72 = vector.shape_cast %71 : vector<1x16x512xbf16> to vector<16x512xbf16>
    %73 = arith.extf %72 : vector<16x512xbf16> to vector<16x512xf32>
    %74 = arith.truncf %69 : vector<16x128xf32> to vector<16x128xbf16>
    %cst_20 = arith.constant dense<0.000000e+00> : vector<16x512xf32>
    %75 = tpu.matmul %74, %3, %cst_20 {dimension_numbers = #tpu.dot_dimension_numbers<[1], [0], [0], [1], [0, 0, 1, 1], [], []>} : vector<16x128xbf16>, vector<128x512xbf16>, vector<16x512xf32> -> vector<16x512xf32>
    %76 = arith.addf %73, %75 : vector<16x512xf32>
    %77 = vector.extract_strided_slice %76 {offsets = [0, 0], sizes = [16, 128], strides = [1, 1]} : vector<16x512xf32> to vector<16x128xf32>
    %78 = arith.negf %77 : vector<16x128xf32>
    %79 = math.exp %78 : vector<16x128xf32>
    %cst_21 = arith.constant 1.000000e+00 : f32
    %80 = vector.broadcast %cst_21 : f32 to vector<16x128xf32>
    %81 = arith.addf %80, %79 : vector<16x128xf32>
    %82 = arith.divf %80, %81 : vector<16x128xf32>
    %83 = vector.extract_strided_slice %76 {offsets = [0, 128], sizes = [16, 128], strides = [1, 1]} : vector<16x512xf32> to vector<16x128xf32>
    %84 = arith.negf %83 : vector<16x128xf32>
    %85 = math.exp %84 : vector<16x128xf32>
    %cst_22 = arith.constant 1.000000e+00 : f32
    %86 = vector.broadcast %cst_22 : f32 to vector<16x128xf32>
    %87 = arith.addf %86, %85 : vector<16x128xf32>
    %88 = arith.divf %86, %87 : vector<16x128xf32>
    %89 = vector.extract_strided_slice %76 {offsets = [0, 256], sizes = [16, 128], strides = [1, 1]} : vector<16x512xf32> to vector<16x128xf32>
    %90 = math.tanh %89 : vector<16x128xf32>
    %91 = vector.extract_strided_slice %76 {offsets = [0, 384], sizes = [16, 128], strides = [1, 1]} : vector<16x512xf32> to vector<16x128xf32>
    %92 = arith.negf %91 : vector<16x128xf32>
    %93 = math.exp %92 : vector<16x128xf32>
    %cst_23 = arith.constant 1.000000e+00 : f32
    %94 = vector.broadcast %cst_23 : f32 to vector<16x128xf32>
    %95 = arith.addf %94, %93 : vector<16x128xf32>
    %96 = arith.divf %94, %95 : vector<16x128xf32>
    %97 = arith.mulf %88, %67 : vector<16x128xf32>
    %98 = arith.mulf %82, %90 : vector<16x128xf32>
    %99 = arith.addf %97, %98 : vector<16x128xf32>
    %100 = math.tanh %99 : vector<16x128xf32>
    %101 = arith.mulf %96, %100 : vector<16x128xf32>
    %c3_i32 = arith.constant 3 : i32
    %102 = arith.index_cast %c3_i32 : i32 to index
    %c0_24 = arith.constant 0 : index
    %c0_25 = arith.constant 0 : index
    %103 = vector.load %arg2[%102, %c0_24, %c0_25] : memref<8x16x512xbf16, #tpu.memory_space<vmem>>, vector<1x16x512xbf16>
    %104 = vector.shape_cast %103 : vector<1x16x512xbf16> to vector<16x512xbf16>
    %105 = arith.extf %104 : vector<16x512xbf16> to vector<16x512xf32>
    %106 = arith.truncf %101 : vector<16x128xf32> to vector<16x128xbf16>
    %cst_26 = arith.constant dense<0.000000e+00> : vector<16x512xf32>
    %107 = tpu.matmul %106, %3, %cst_26 {dimension_numbers = #tpu.dot_dimension_numbers<[1], [0], [0], [1], [0, 0, 1, 1], [], []>} : vector<16x128xbf16>, vector<128x512xbf16>, vector<16x512xf32> -> vector<16x512xf32>
    %108 = arith.addf %105, %107 : vector<16x512xf32>
    %109 = vector.extract_strided_slice %108 {offsets = [0, 0], sizes = [16, 128], strides = [1, 1]} : vector<16x512xf32> to vector<16x128xf32>
    %110 = arith.negf %109 : vector<16x128xf32>
    %111 = math.exp %110 : vector<16x128xf32>
    %cst_27 = arith.constant 1.000000e+00 : f32
    %112 = vector.broadcast %cst_27 : f32 to vector<16x128xf32>
    %113 = arith.addf %112, %111 : vector<16x128xf32>
    %114 = arith.divf %112, %113 : vector<16x128xf32>
    %115 = vector.extract_strided_slice %108 {offsets = [0, 128], sizes = [16, 128], strides = [1, 1]} : vector<16x512xf32> to vector<16x128xf32>
    %116 = arith.negf %115 : vector<16x128xf32>
    %117 = math.exp %116 : vector<16x128xf32>
    %cst_28 = arith.constant 1.000000e+00 : f32
    %118 = vector.broadcast %cst_28 : f32 to vector<16x128xf32>
    %119 = arith.addf %118, %117 : vector<16x128xf32>
    %120 = arith.divf %118, %119 : vector<16x128xf32>
    %121 = vector.extract_strided_slice %108 {offsets = [0, 256], sizes = [16, 128], strides = [1, 1]} : vector<16x512xf32> to vector<16x128xf32>
    %122 = math.tanh %121 : vector<16x128xf32>
    %123 = vector.extract_strided_slice %108 {offsets = [0, 384], sizes = [16, 128], strides = [1, 1]} : vector<16x512xf32> to vector<16x128xf32>
    %124 = arith.negf %123 : vector<16x128xf32>
    %125 = math.exp %124 : vector<16x128xf32>
    %cst_29 = arith.constant 1.000000e+00 : f32
    %126 = vector.broadcast %cst_29 : f32 to vector<16x128xf32>
    %127 = arith.addf %126, %125 : vector<16x128xf32>
    %128 = arith.divf %126, %127 : vector<16x128xf32>
    %129 = arith.mulf %120, %99 : vector<16x128xf32>
    %130 = arith.mulf %114, %122 : vector<16x128xf32>
    %131 = arith.addf %129, %130 : vector<16x128xf32>
    %132 = math.tanh %131 : vector<16x128xf32>
    %133 = arith.mulf %128, %132 : vector<16x128xf32>
    %c4_i32 = arith.constant 4 : i32
    %134 = arith.index_cast %c4_i32 : i32 to index
    %c0_30 = arith.constant 0 : index
    %c0_31 = arith.constant 0 : index
    %135 = vector.load %arg2[%134, %c0_30, %c0_31] : memref<8x16x512xbf16, #tpu.memory_space<vmem>>, vector<1x16x512xbf16>
    %136 = vector.shape_cast %135 : vector<1x16x512xbf16> to vector<16x512xbf16>
    %137 = arith.extf %136 : vector<16x512xbf16> to vector<16x512xf32>
    %138 = arith.truncf %133 : vector<16x128xf32> to vector<16x128xbf16>
    %cst_32 = arith.constant dense<0.000000e+00> : vector<16x512xf32>
    %139 = tpu.matmul %138, %3, %cst_32 {dimension_numbers = #tpu.dot_dimension_numbers<[1], [0], [0], [1], [0, 0, 1, 1], [], []>} : vector<16x128xbf16>, vector<128x512xbf16>, vector<16x512xf32> -> vector<16x512xf32>
    %140 = arith.addf %137, %139 : vector<16x512xf32>
    %141 = vector.extract_strided_slice %140 {offsets = [0, 0], sizes = [16, 128], strides = [1, 1]} : vector<16x512xf32> to vector<16x128xf32>
    %142 = arith.negf %141 : vector<16x128xf32>
    %143 = math.exp %142 : vector<16x128xf32>
    %cst_33 = arith.constant 1.000000e+00 : f32
    %144 = vector.broadcast %cst_33 : f32 to vector<16x128xf32>
    %145 = arith.addf %144, %143 : vector<16x128xf32>
    %146 = arith.divf %144, %145 : vector<16x128xf32>
    %147 = vector.extract_strided_slice %140 {offsets = [0, 128], sizes = [16, 128], strides = [1, 1]} : vector<16x512xf32> to vector<16x128xf32>
    %148 = arith.negf %147 : vector<16x128xf32>
    %149 = math.exp %148 : vector<16x128xf32>
    %cst_34 = arith.constant 1.000000e+00 : f32
    %150 = vector.broadcast %cst_34 : f32 to vector<16x128xf32>
    %151 = arith.addf %150, %149 : vector<16x128xf32>
    %152 = arith.divf %150, %151 : vector<16x128xf32>
    %153 = vector.extract_strided_slice %140 {offsets = [0, 256], sizes = [16, 128], strides = [1, 1]} : vector<16x512xf32> to vector<16x128xf32>
    %154 = math.tanh %153 : vector<16x128xf32>
    %155 = vector.extract_strided_slice %140 {offsets = [0, 384], sizes = [16, 128], strides = [1, 1]} : vector<16x512xf32> to vector<16x128xf32>
    %156 = arith.negf %155 : vector<16x128xf32>
    %157 = math.exp %156 : vector<16x128xf32>
    %cst_35 = arith.constant 1.000000e+00 : f32
    %158 = vector.broadcast %cst_35 : f32 to vector<16x128xf32>
    %159 = arith.addf %158, %157 : vector<16x128xf32>
    %160 = arith.divf %158, %159 : vector<16x128xf32>
    %161 = arith.mulf %152, %131 : vector<16x128xf32>
    %162 = arith.mulf %146, %154 : vector<16x128xf32>
    %163 = arith.addf %161, %162 : vector<16x128xf32>
    %164 = math.tanh %163 : vector<16x128xf32>
    %165 = arith.mulf %160, %164 : vector<16x128xf32>
    %c5_i32 = arith.constant 5 : i32
    %166 = arith.index_cast %c5_i32 : i32 to index
    %c0_36 = arith.constant 0 : index
    %c0_37 = arith.constant 0 : index
    %167 = vector.load %arg2[%166, %c0_36, %c0_37] : memref<8x16x512xbf16, #tpu.memory_space<vmem>>, vector<1x16x512xbf16>
    %168 = vector.shape_cast %167 : vector<1x16x512xbf16> to vector<16x512xbf16>
    %169 = arith.extf %168 : vector<16x512xbf16> to vector<16x512xf32>
    %170 = arith.truncf %165 : vector<16x128xf32> to vector<16x128xbf16>
    %cst_38 = arith.constant dense<0.000000e+00> : vector<16x512xf32>
    %171 = tpu.matmul %170, %3, %cst_38 {dimension_numbers = #tpu.dot_dimension_numbers<[1], [0], [0], [1], [0, 0, 1, 1], [], []>} : vector<16x128xbf16>, vector<128x512xbf16>, vector<16x512xf32> -> vector<16x512xf32>
    %172 = arith.addf %169, %171 : vector<16x512xf32>
    %173 = vector.extract_strided_slice %172 {offsets = [0, 0], sizes = [16, 128], strides = [1, 1]} : vector<16x512xf32> to vector<16x128xf32>
    %174 = arith.negf %173 : vector<16x128xf32>
    %175 = math.exp %174 : vector<16x128xf32>
    %cst_39 = arith.constant 1.000000e+00 : f32
    %176 = vector.broadcast %cst_39 : f32 to vector<16x128xf32>
    %177 = arith.addf %176, %175 : vector<16x128xf32>
    %178 = arith.divf %176, %177 : vector<16x128xf32>
    %179 = vector.extract_strided_slice %172 {offsets = [0, 128], sizes = [16, 128], strides = [1, 1]} : vector<16x512xf32> to vector<16x128xf32>
    %180 = arith.negf %179 : vector<16x128xf32>
    %181 = math.exp %180 : vector<16x128xf32>
    %cst_40 = arith.constant 1.000000e+00 : f32
    %182 = vector.broadcast %cst_40 : f32 to vector<16x128xf32>
    %183 = arith.addf %182, %181 : vector<16x128xf32>
    %184 = arith.divf %182, %183 : vector<16x128xf32>
    %185 = vector.extract_strided_slice %172 {offsets = [0, 256], sizes = [16, 128], strides = [1, 1]} : vector<16x512xf32> to vector<16x128xf32>
    %186 = math.tanh %185 : vector<16x128xf32>
    %187 = vector.extract_strided_slice %172 {offsets = [0, 384], sizes = [16, 128], strides = [1, 1]} : vector<16x512xf32> to vector<16x128xf32>
    %188 = arith.negf %187 : vector<16x128xf32>
    %189 = math.exp %188 : vector<16x128xf32>
    %cst_41 = arith.constant 1.000000e+00 : f32
    %190 = vector.broadcast %cst_41 : f32 to vector<16x128xf32>
    %191 = arith.addf %190, %189 : vector<16x128xf32>
    %192 = arith.divf %190, %191 : vector<16x128xf32>
    %193 = arith.mulf %184, %163 : vector<16x128xf32>
    %194 = arith.mulf %178, %186 : vector<16x128xf32>
    %195 = arith.addf %193, %194 : vector<16x128xf32>
    %196 = math.tanh %195 : vector<16x128xf32>
    %197 = arith.mulf %192, %196 : vector<16x128xf32>
    %c6_i32 = arith.constant 6 : i32
    %198 = arith.index_cast %c6_i32 : i32 to index
    %c0_42 = arith.constant 0 : index
    %c0_43 = arith.constant 0 : index
    %199 = vector.load %arg2[%198, %c0_42, %c0_43] : memref<8x16x512xbf16, #tpu.memory_space<vmem>>, vector<1x16x512xbf16>
    %200 = vector.shape_cast %199 : vector<1x16x512xbf16> to vector<16x512xbf16>
    %201 = arith.extf %200 : vector<16x512xbf16> to vector<16x512xf32>
    %202 = arith.truncf %197 : vector<16x128xf32> to vector<16x128xbf16>
    %cst_44 = arith.constant dense<0.000000e+00> : vector<16x512xf32>
    %203 = tpu.matmul %202, %3, %cst_44 {dimension_numbers = #tpu.dot_dimension_numbers<[1], [0], [0], [1], [0, 0, 1, 1], [], []>} : vector<16x128xbf16>, vector<128x512xbf16>, vector<16x512xf32> -> vector<16x512xf32>
    %204 = arith.addf %201, %203 : vector<16x512xf32>
    %205 = vector.extract_strided_slice %204 {offsets = [0, 0], sizes = [16, 128], strides = [1, 1]} : vector<16x512xf32> to vector<16x128xf32>
    %206 = arith.negf %205 : vector<16x128xf32>
    %207 = math.exp %206 : vector<16x128xf32>
    %cst_45 = arith.constant 1.000000e+00 : f32
    %208 = vector.broadcast %cst_45 : f32 to vector<16x128xf32>
    %209 = arith.addf %208, %207 : vector<16x128xf32>
    %210 = arith.divf %208, %209 : vector<16x128xf32>
    %211 = vector.extract_strided_slice %204 {offsets = [0, 128], sizes = [16, 128], strides = [1, 1]} : vector<16x512xf32> to vector<16x128xf32>
    %212 = arith.negf %211 : vector<16x128xf32>
    %213 = math.exp %212 : vector<16x128xf32>
    %cst_46 = arith.constant 1.000000e+00 : f32
    %214 = vector.broadcast %cst_46 : f32 to vector<16x128xf32>
    %215 = arith.addf %214, %213 : vector<16x128xf32>
    %216 = arith.divf %214, %215 : vector<16x128xf32>
    %217 = vector.extract_strided_slice %204 {offsets = [0, 256], sizes = [16, 128], strides = [1, 1]} : vector<16x512xf32> to vector<16x128xf32>
    %218 = math.tanh %217 : vector<16x128xf32>
    %219 = vector.extract_strided_slice %204 {offsets = [0, 384], sizes = [16, 128], strides = [1, 1]} : vector<16x512xf32> to vector<16x128xf32>
    %220 = arith.negf %219 : vector<16x128xf32>
    %221 = math.exp %220 : vector<16x128xf32>
    %cst_47 = arith.constant 1.000000e+00 : f32
    %222 = vector.broadcast %cst_47 : f32 to vector<16x128xf32>
    %223 = arith.addf %222, %221 : vector<16x128xf32>
    %224 = arith.divf %222, %223 : vector<16x128xf32>
    %225 = arith.mulf %216, %195 : vector<16x128xf32>
    %226 = arith.mulf %210, %218 : vector<16x128xf32>
    %227 = arith.addf %225, %226 : vector<16x128xf32>
    %228 = math.tanh %227 : vector<16x128xf32>
    %229 = arith.mulf %224, %228 : vector<16x128xf32>
    %c7_i32 = arith.constant 7 : i32
    %230 = arith.index_cast %c7_i32 : i32 to index
    %c0_48 = arith.constant 0 : index
    %c0_49 = arith.constant 0 : index
    %231 = vector.load %arg2[%230, %c0_48, %c0_49] : memref<8x16x512xbf16, #tpu.memory_space<vmem>>, vector<1x16x512xbf16>
    %232 = vector.shape_cast %231 : vector<1x16x512xbf16> to vector<16x512xbf16>
    %233 = arith.extf %232 : vector<16x512xbf16> to vector<16x512xf32>
    %234 = arith.truncf %229 : vector<16x128xf32> to vector<16x128xbf16>
    %cst_50 = arith.constant dense<0.000000e+00> : vector<16x512xf32>
    %235 = tpu.matmul %234, %3, %cst_50 {dimension_numbers = #tpu.dot_dimension_numbers<[1], [0], [0], [1], [0, 0, 1, 1], [], []>} : vector<16x128xbf16>, vector<128x512xbf16>, vector<16x512xf32> -> vector<16x512xf32>
    %236 = arith.addf %233, %235 : vector<16x512xf32>
    %237 = vector.extract_strided_slice %236 {offsets = [0, 0], sizes = [16, 128], strides = [1, 1]} : vector<16x512xf32> to vector<16x128xf32>
    %238 = arith.negf %237 : vector<16x128xf32>
    %239 = math.exp %238 : vector<16x128xf32>
    %cst_51 = arith.constant 1.000000e+00 : f32
    %240 = vector.broadcast %cst_51 : f32 to vector<16x128xf32>
    %241 = arith.addf %240, %239 : vector<16x128xf32>
    %242 = arith.divf %240, %241 : vector<16x128xf32>
    %243 = vector.extract_strided_slice %236 {offsets = [0, 128], sizes = [16, 128], strides = [1, 1]} : vector<16x512xf32> to vector<16x128xf32>
    %244 = arith.negf %243 : vector<16x128xf32>
    %245 = math.exp %244 : vector<16x128xf32>
    %cst_52 = arith.constant 1.000000e+00 : f32
    %246 = vector.broadcast %cst_52 : f32 to vector<16x128xf32>
    %247 = arith.addf %246, %245 : vector<16x128xf32>
    %248 = arith.divf %246, %247 : vector<16x128xf32>
    %249 = vector.extract_strided_slice %236 {offsets = [0, 256], sizes = [16, 128], strides = [1, 1]} : vector<16x512xf32> to vector<16x128xf32>
    %250 = math.tanh %249 : vector<16x128xf32>
    %251 = vector.extract_strided_slice %236 {offsets = [0, 384], sizes = [16, 128], strides = [1, 1]} : vector<16x512xf32> to vector<16x128xf32>
    %252 = arith.negf %251 : vector<16x128xf32>
    %253 = math.exp %252 : vector<16x128xf32>
    %cst_53 = arith.constant 1.000000e+00 : f32
    %254 = vector.broadcast %cst_53 : f32 to vector<16x128xf32>
    %255 = arith.addf %254, %253 : vector<16x128xf32>
    %256 = arith.divf %254, %255 : vector<16x128xf32>
    %257 = arith.mulf %248, %227 : vector<16x128xf32>
    %258 = arith.mulf %242, %250 : vector<16x128xf32>
    %259 = arith.addf %257, %258 : vector<16x128xf32>
    %260 = math.tanh %259 : vector<16x128xf32>
    %261 = arith.mulf %256, %260 : vector<16x128xf32>
    %c8_i32 = arith.constant 8 : i32
    %c0_54 = arith.constant 0 : index
    %c0_55 = arith.constant 0 : index
    %262 = vector.load %arg7[%c0_54, %c0_55] : memref<16x128xf32, #tpu.memory_space<vmem>>, vector<16x128xf32>
    tpu.vector_store %arg7[%c0_54, %c0_55], %261 {strides = array<i32>} : memref<16x128xf32, #tpu.memory_space<vmem>>, vector<16x128xf32>,
    %c0_56 = arith.constant 0 : index
    %c0_57 = arith.constant 0 : index
    %263 = vector.load %arg8[%c0_56, %c0_57] : memref<16x128xf32, #tpu.memory_space<vmem>>, vector<16x128xf32>
    tpu.vector_store %arg8[%c0_56, %c0_57], %259 {strides = array<i32>} : memref<16x128xf32, #tpu.memory_space<vmem>>, vector<16x128xf32>,
    %c0_i32_58 = arith.constant 0 : i32
    %264 = arith.cmpi eq, %arg1, %c0_i32_58 : i32
    %265 = arith.extui %264 : i1 to i32
    %c0_i32_59 = arith.constant 0 : i32
    %266 = arith.cmpi ne, %265, %c0_i32_59 : i32
    scf.if %266 {
      %c0_60 = arith.constant 0 : index
      %c0_61 = arith.constant 0 : index
      %267 = vector.load %arg4[%c0_60, %c0_61] : memref<16x128xf32, #tpu.memory_space<vmem>>, vector<16x128xf32>
      tpu.vector_store %arg4[%c0_60, %c0_61], %261 {strides = array<i32>} : memref<16x128xf32, #tpu.memory_space<vmem>>, vector<16x128xf32>,
      %c0_62 = arith.constant 0 : index
      %c0_63 = arith.constant 0 : index
      %268 = vector.load %arg5[%c0_62, %c0_63] : memref<16x128xf32, #tpu.memory_space<vmem>>, vector<16x128xf32>
      tpu.vector_store %arg5[%c0_62, %c0_63], %259 {strides = array<i32>} : memref<16x128xf32, #tpu.memory_space<vmem>>, vector<16x128xf32>,
    } else {
    }
    return
  }
  func.func @transform_0(%arg0: i32, %arg1: i32) -> (i32, i32, i32) {
    %c0_i32 = arith.constant 0 : i32
    %c0_i32_0 = arith.constant 0 : i32
    return %arg1, %arg0, %c0_i32 : i32, i32, i32
  }
  func.func @transform_2(%arg0: i32, %arg1: i32) -> (i32, i32) {
    %c0_i32 = arith.constant 0 : i32
    %c0_i32_0 = arith.constant 0 : i32
    return %arg0, %c0_i32 : i32, i32
  }
  func.func @transform_3(%arg0: i32, %arg1: i32) -> (i32, i32) {
    %c0_i32 = arith.constant 0 : i32
    %c0_i32_0 = arith.constant 0 : i32
    return %arg0, %c0_i32 : i32, i32
  }
}

</mosaic_0001>

<llo_original>
// kernel: tpu_custom_call.1
$region0: #{tpu_custom_call.1}
  #allocation0 [shape = 'u32[]', space=smem, size = 0x4, offset = 0x4, fixed_abs, tag = 'smem constant byte address 0x4 - core index']
  #allocation1 [shape = 'u32[72,128]{1,0:T(1,128)}', space=vmem, size = 0x9000, scoped, tag = 'internal scratch']
  #allocation2 [shape = 'bf16[128,512]{1,0:T(8,128)(2,1)}', space=vmem, size = 0x20000, scoped, tag = 'scratch operand']
  #allocation3 [shape = 'f32[16,128]{1,0:T(8,128)}', space=vmem, size = 0x2000, scoped, tag = 'scratch operand']
  #allocation4 [shape = 'f32[16,128]{1,0:T(8,128)}', space=vmem, size = 0x2000, scoped, tag = 'scratch operand']
  #allocation12 [shape = 's32[]', space=sflag, size = 0x4, offset = 0, fixed_abs, tag = 'sflag constant byte address 0x0 - dummy sync flag']
  #allocation13 [shape = 's32[]', space=sflag, size = 0x4, offset = 0, fixed_abs, tag = 'sflag constant byte address 0x0 - dummy sync flag']
  #allocation14 [shape = 'u32[]', space=smem, size = 0x4, offset = 0x44, fixed_abs, tag = 'smem constant byte address 0x44 - assertion arg 0']
  #allocation15 [shape = 'u32[]', space=smem, size = 0x4, offset = 0x48, fixed_abs, tag = 'smem constant byte address 0x48 - assertion arg 1']
  %s0 = inlined_call_operand.hbm [shape: bf16[8,16,512], index: 0, kind: input, shape index: {}]
  %s1 = inlined_call_operand.hbm [shape: bf16[128,512], index: 1, kind: input, shape index: {}]
  %s2 = inlined_call_operand.hbm [shape: f32[16,128], index: 2, kind: output, shape index: {0}]
  %s3 = inlined_call_operand.hbm [shape: f32[16,128], index: 3, kind: output, shape index: {1}]
  %4 = xla_tuple %s2, %s3
  %s5 = sld [smem:[#allocation0]]
  $region39: #{tpu_custom_call.1} parent=0
    _
  %s7 = ssub.s32 1, %s5
  %s8 = scalar_select 0, %s7, %s5
  $region1: #{tpu_custom_call.1} parent=0
    #allocation5 [shape = 'u8[131072]{0}', space=vmem, size = 0x20000, scoped, tag = 'input window, operand 0, single buffered']
    #allocation6 [shape = 's32[1]{0}', space=sflag, size = 0x4, scoped, tag = 'scoped memory for tpu_custom_call.1']
    #allocation7 [shape = 's32[1]{0}', space=sflag, size = 0x4, scoped, tag = 'scoped memory for tpu_custom_call.1']
    #allocation8 [shape = 'u8[8192]{0}', space=vmem, size = 0x2000, scoped, tag = 'output window, operand 0, single buffered']
    #allocation9 [shape = 'u8[8192]{0}', space=vmem, size = 0x2000, scoped, tag = 'output window, operand 1, single buffered']
    #allocation10 [shape = 's32[1]{0}', space=sflag, size = 0x4, scoped, tag = 'scoped memory for tpu_custom_call.1']
    %9 = vsyncpa [#allocation6], 0
    %10 = vsyncpa [#allocation7], 0
    %11 = vsyncpa [#allocation10], 0
    // Predicated region
    $region2: #{tpu_custom_call.1} parent=1 // pred_check
      _
    $region3: #{tpu_custom_call.1} parent=1 // pred_check_branch
      %13 = sbr.rel (0) target = $region5
    $region4: #{tpu_custom_call.1} parent=1 // pred_region
      %15 = vsyncadd [#allocation6], 0
      %s16 = sshll.u32 %s0, 4
      %s17 = int_to_ptr.hbm [resolvable:$true] %s16
      %s18 = sshll.u32 [#allocation5], 4
      %s19 = int_to_ptr.vmem [resolvable:$true] %s18
      %24 = dma.hbm_to_vmem [thread:$0]  %s17, 4096, %s19, [#allocation6], 256, 256, 16
    $region5: #{tpu_custom_call.1} parent=1 // pred_fallthru
      _
    // Predicated region
    $region6: #{tpu_custom_call.1} parent=1 // pred_check
      _
    $region7: #{tpu_custom_call.1} parent=1 // pred_check_branch
      %26 = sbr.rel (0) target = $region9
    $region8: #{tpu_custom_call.1} parent=1 // pred_region
      %28 = dma.done [#allocation6], 4096
    $region9: #{tpu_custom_call.1} parent=1 // pred_fallthru
      _
    %p29 = scmp.eq.s32.totalorder 0, 0
    // Predicated region
    $region10: #{tpu_custom_call.1} parent=1 // pred_check
      %p30 = pneg %p29
    $region11: #{tpu_custom_call.1} parent=1 // pred_check_branch
      %32 = sbr.rel (%p30) target = $region13
    $region12: #{tpu_custom_call.1} parent=1 // pred_region
      $region14: #{tpu_custom_call.1} parent=12
        #allocation11 [shape = 's32[1]{0}', space=sflag, size = 0x4, scoped, tag = 'scoped memory for tpu_custom_call.1']
        // Predicated region
        $region15: #{tpu_custom_call.1} parent=14 // pred_check
          _
        $region16: #{tpu_custom_call.1} parent=14 // pred_check_branch
          %34 = sbr.rel target = $region18
        $region17: #{tpu_custom_call.1} parent=14 // pred_region
          %35 = sst [smem:[#allocation14]] [#allocation13]
          %36 = sst [smem:[#allocation15]] [#allocation12]
        $region18: #{tpu_custom_call.1} parent=14 // pred_fallthru
          _
        %38 = shalt.err (0)
        %s40 = sshll.u32 %s1, 4
        %s41 = int_to_ptr.hbm [resolvable:$true] %s40
        %s42 = sshll.u32 [#allocation2], 4
        %s43 = int_to_ptr.vmem [resolvable:$true] %s42
        %45 = dma.hbm_to_vmem [thread:$0]  %s41, 4096, %s43, [#allocation11]
        %s46 = smul.u32 4, 16
        %s47 = smul.u32 %s46, 4
        %s48 = sshll.u32 %s47, 4
        %49 = dma.done [#allocation11], %s48
      %50 = vst [vmem:[#allocation3] sm:$0xff] 0.0
      %51 = vst [vmem:[#allocation3 + $0x8] sm:$0xff] 0.0
      %52 = vst [vmem:[#allocation4] sm:$0xff] 0.0
      %53 = vst [vmem:[#allocation4 + $0x8] sm:$0xff] 0.0
    $region13: #{tpu_custom_call.1} parent=1 // pred_fallthru
      _
    %v54 = vld [vmem:[#allocation2] sm:$0xff]
    %v55 = vld [vmem:[#allocation2 + $0x8] sm:$0xff]
    %v56 = vld [vmem:[#allocation2 + $0x10] sm:$0xff]
    %v57 = vld [vmem:[#allocation2 + $0x18] sm:$0xff]
    %v58 = vld [vmem:[#allocation2 + $0x20] sm:$0xff]
    %v59 = vld [vmem:[#allocation2 + $0x28] sm:$0xff]
    %v60 = vld [vmem:[#allocation2 + $0x30] sm:$0xff]
    %v61 = vld [vmem:[#allocation2 + $0x38] sm:$0xff]
    %v62 = vld [vmem:[#allocation2 + $0x40] sm:$0xff]
    %v63 = vld [vmem:[#allocation2 + $0x48] sm:$0xff]
    %v64 = vld [vmem:[#allocation2 + $0x50] sm:$0xff]
    %v65 = vld [vmem:[#allocation2 + $0x58] sm:$0xff]
    %v66 = vld [vmem:[#allocation2 + $0x60] sm:$0xff]
    %v67 = vld [vmem:[#allocation2 + $0x68] sm:$0xff]
    %v68 = vld [vmem:[#allocation2 + $0x70] sm:$0xff]
    %v69 = vld [vmem:[#allocation2 + $0x78] sm:$0xff]
    %v70 = vld [vmem:[#allocation2 + $0x80] sm:$0xff]
    %v71 = vld [vmem:[#allocation2 + $0x88] sm:$0xff]
    %v72 = vld [vmem:[#allocation2 + $0x90] sm:$0xff]
    %v73 = vld [vmem:[#allocation2 + $0x98] sm:$0xff]
    %v74 = vld [vmem:[#allocation2 + $0xa0] sm:$0xff]
    %v75 = vld [vmem:[#allocation2 + $0xa8] sm:$0xff]
    %v76 = vld [vmem:[#allocation2 + $0xb0] sm:$0xff]
    %v77 = vld [vmem:[#allocation2 + $0xb8] sm:$0xff]
    %v78 = vld [vmem:[#allocation2 + $0xc0] sm:$0xff]
    %v79 = vld [vmem:[#allocation2 + $0xc8] sm:$0xff]
    %v80 = vld [vmem:[#allocation2 + $0xd0] sm:$0xff]
    %v81 = vld [vmem:[#allocation2 + $0xd8] sm:$0xff]
    %v82 = vld [vmem:[#allocation2 + $0xe0] sm:$0xff]
    %v83 = vld [vmem:[#allocation2 + $0xe8] sm:$0xff]
    %v84 = vld [vmem:[#allocation2 + $0xf0] sm:$0xff]
    %v85 = vld [vmem:[#allocation2 + $0xf8] sm:$0xff]
    %v86 = vld [vmem:[#allocation3] sm:$0xff]
    %v87 = vld [vmem:[#allocation3 + $0x8] sm:$0xff]
    %v88 = vld [vmem:[#allocation4] sm:$0xff]
    %v89 = vld [vmem:[#allocation4 + $0x8] sm:$0xff]
    %v90 = vld [vmem:[#allocation5] sm:$0xff]
    %v91 = vld [vmem:[#allocation5 + $0x8] sm:$0xff]
    %v92 = vld [vmem:[#allocation5 + $0x10] sm:$0xff]
    %v93 = vld [vmem:[#allocation5 + $0x18] sm:$0xff]
    %v94 = vunpack.c.l.bf16 %v90
    %v95 = vunpack.c.h.bf16 %v90
    %v96 = vunpack.c.l.bf16 %v91
    %v97 = vunpack.c.h.bf16 %v91
    %v98 = vunpack.c.l.bf16 %v92
    %v99 = vunpack.c.h.bf16 %v92
    %v100 = vunpack.c.l.bf16 %v93
    %v101 = vunpack.c.h.bf16 %v93
    %v102 = vpack.c.bf16 %v87, %v86
    %v135 = vunpack.c.l.b16 %v54
    %v136 = vunpack.c.h.b16 %v54
    %v137 = vunpack.c.l.b16 %v55
    %v138 = vunpack.c.h.b16 %v55
    %v139 = vunpack.c.l.b16 %v56
    %v140 = vunpack.c.h.b16 %v56
    %v141 = vunpack.c.l.b16 %v57
    %v142 = vunpack.c.h.b16 %v57
    %v143 = vunpack.c.l.b16 %v58
    %v144 = vunpack.c.h.b16 %v58
    %v145 = vunpack.c.l.b16 %v59
    %v146 = vunpack.c.h.b16 %v59
    %v147 = vunpack.c.l.b16 %v60
    %v148 = vunpack.c.h.b16 %v60
    %v149 = vunpack.c.l.b16 %v61
    %v150 = vunpack.c.h.b16 %v61
    %v151 = vunpack.c.l.b16 %v62
    %v152 = vunpack.c.h.b16 %v62
    %v153 = vunpack.c.l.b16 %v63
    %v154 = vunpack.c.h.b16 %v63
    %v155 = vunpack.c.l.b16 %v64
    %v156 = vunpack.c.h.b16 %v64
    %v157 = vunpack.c.l.b16 %v65
    %v158 = vunpack.c.h.b16 %v65
    %v159 = vunpack.c.l.b16 %v66
    %v160 = vunpack.c.h.b16 %v66
    %v161 = vunpack.c.l.b16 %v67
    %v162 = vunpack.c.h.b16 %v67
    %v163 = vunpack.c.l.b16 %v68
    %v164 = vunpack.c.h.b16 %v68
    %v165 = vunpack.c.l.b16 %v69
    %v166 = vunpack.c.h.b16 %v69
    %v167 = vunpack.c.l.b16 %v70
    %v168 = vunpack.c.h.b16 %v70
    %v169 = vunpack.c.l.b16 %v71
    %v170 = vunpack.c.h.b16 %v71
    %v171 = vunpack.c.l.b16 %v72
    %v172 = vunpack.c.h.b16 %v72
    %v173 = vunpack.c.l.b16 %v73
    %v174 = vunpack.c.h.b16 %v73
    %v175 = vunpack.c.l.b16 %v74
    %v176 = vunpack.c.h.b16 %v74
    %v177 = vunpack.c.l.b16 %v75
    %v178 = vunpack.c.h.b16 %v75
    %v179 = vunpack.c.l.b16 %v76
    %v180 = vunpack.c.h.b16 %v76
    %v181 = vunpack.c.l.b16 %v77
    %v182 = vunpack.c.h.b16 %v77
    %v183 = vunpack.c.l.b16 %v78
    %v184 = vunpack.c.h.b16 %v78
    %v185 = vunpack.c.l.b16 %v79
    %v186 = vunpack.c.h.b16 %v79
    %v187 = vunpack.c.l.b16 %v80
    %v188 = vunpack.c.h.b16 %v80
    %v189 = vunpack.c.l.b16 %v81
    %v190 = vunpack.c.h.b16 %v81
    %v191 = vunpack.c.l.b16 %v82
    %v192 = vunpack.c.h.b16 %v82
    %v193 = vunpack.c.l.b16 %v83
    %v194 = vunpack.c.h.b16 %v83
    %v195 = vunpack.c.l.b16 %v84
    %v196 = vunpack.c.h.b16 %v84
    %v197 = vunpack.c.l.b16 %v85
    %v198 = vunpack.c.h.b16 %v85
    %v199 = vpack.c.b16 %v139, %v135
    %v200 = vpack.c.b16 %v140, %v136
    %v201 = vpack.c.b16 %v141, %v137
    %v202 = vpack.c.b16 %v142, %v138
    %v203 = vpack.c.b16 %v147, %v143
    %v204 = vpack.c.b16 %v148, %v144
    %v205 = vpack.c.b16 %v149, %v145
    %v206 = vpack.c.b16 %v150, %v146
    %v207 = vpack.c.b16 %v155, %v151
    %v208 = vpack.c.b16 %v156, %v152
    %v209 = vpack.c.b16 %v157, %v153
    %v210 = vpack.c.b16 %v158, %v154
    %v211 = vpack.c.b16 %v163, %v159
    %v212 = vpack.c.b16 %v164, %v160
    %v213 = vpack.c.b16 %v165, %v161
    %v214 = vpack.c.b16 %v166, %v162
    %v215 = vpack.c.b16 %v171, %v167
    %v216 = vpack.c.b16 %v172, %v168
    %v217 = vpack.c.b16 %v173, %v169
    %v218 = vpack.c.b16 %v174, %v170
    %v219 = vpack.c.b16 %v179, %v175
    %v220 = vpack.c.b16 %v180, %v176
    %v221 = vpack.c.b16 %v181, %v177
    %v222 = vpack.c.b16 %v182, %v178
    %v223 = vpack.c.b16 %v187, %v183
    %v224 = vpack.c.b16 %v188, %v184
    %v225 = vpack.c.b16 %v189, %v185
    %v226 = vpack.c.b16 %v190, %v186
    %v227 = vpack.c.b16 %v195, %v191
    %v228 = vpack.c.b16 %v196, %v192
    %v229 = vpack.c.b16 %v197, %v193
    %v230 = vpack.c.b16 %v198, %v194
    %263 = vmatpush.bf16.msra.mxu0 %v227
    %264 = vmatpush.bf16.msra.mxu0 %v223
    %265 = vmatpush.bf16.msra.mxu0 %v219
    %266 = vmatpush.bf16.msra.mxu0 %v215
    %267 = vmatpush.bf16.msra.mxu0 %v211
    %268 = vmatpush.bf16.msra.mxu0 %v207
    %269 = vmatpush.bf16.msra.mxu0 %v203
    %270 = vmatpush.bf16.msra.mxu0 %v199
    %271 = vmatmul.bf16.gmra.mxu0 %v102
    %v272 = vpop.f32.mrf.mxu0
    %v273 = vadd.f32 0.0, %v272
    %v274 = vpop.f32.mrf.mxu0
    %v275 = vadd.f32 0.0, %v274
    %276 = vdwg.mxu0
    %277 = vmatpush.bf16.msra.mxu0 %v228
    %278 = vmatpush.bf16.msra.mxu0 %v224
    %279 = vmatpush.bf16.msra.mxu0 %v220
    %280 = vmatpush.bf16.msra.mxu0 %v216
    %281 = vmatpush.bf16.msra.mxu0 %v212
    %282 = vmatpush.bf16.msra.mxu0 %v208
    %283 = vmatpush.bf16.msra.mxu0 %v204
    %284 = vmatpush.bf16.msra.mxu0 %v200
    %285 = vmatmul.bf16.gmra.mxu0 %v102
    %v286 = vpop.f32.mrf.mxu0
    %v287 = vadd.f32 0.0, %v286
    %v288 = vpop.f32.mrf.mxu0
    %v289 = vadd.f32 0.0, %v288
    %290 = vdwg.mxu0
    %291 = vmatpush.bf16.msra.mxu0 %v229
    %292 = vmatpush.bf16.msra.mxu0 %v225
    %293 = vmatpush.bf16.msra.mxu0 %v221
    %294 = vmatpush.bf16.msra.mxu0 %v217
    %295 = vmatpush.bf16.msra.mxu0 %v213
    %296 = vmatpush.bf16.msra.mxu0 %v209
    %297 = vmatpush.bf16.msra.mxu0 %v205
    %298 = vmatpush.bf16.msra.mxu0 %v201
    %299 = vmatmul.bf16.gmra.mxu0 %v102
    %v300 = vpop.f32.mrf.mxu0
    %v301 = vadd.f32 0.0, %v300
    %v302 = vpop.f32.mrf.mxu0
    %v303 = vadd.f32 0.0, %v302
    %304 = vdwg.mxu0
    %305 = vmatpush.bf16.msra.mxu0 %v230
    %306 = vmatpush.bf16.msra.mxu0 %v226
    %307 = vmatpush.bf16.msra.mxu0 %v222
    %308 = vmatpush.bf16.msra.mxu0 %v218
    %309 = vmatpush.bf16.msra.mxu0 %v214
    %310 = vmatpush.bf16.msra.mxu0 %v210
    %311 = vmatpush.bf16.msra.mxu0 %v206
    %312 = vmatpush.bf16.msra.mxu0 %v202
    %313 = vmatmul.bf16.gmra.mxu0 %v102
    %v314 = vpop.f32.mrf.mxu0
    %v315 = vadd.f32 0.0, %v314
    %v316 = vpop.f32.mrf.mxu0
    %v317 = vadd.f32 0.0, %v316
    %318 = vdwg.mxu0
    %v319 = vadd.f32 %v94, %v273
    %v320 = vadd.f32 %v95, %v287
    %v321 = vadd.f32 %v96, %v301
    %v322 = vadd.f32 %v97, %v315
    %v323 = vadd.f32 %v98, %v275
    %v324 = vadd.f32 %v99, %v289
    %v325 = vadd.f32 %v100, %v303
    %v326 = vadd.f32 %v101, %v317
    %v327 = vxor.u32 %v319, 2147483648
    %v328 = vxor.u32 %v323, 2147483648
    %v329 = vmul.f32 %v327, 1.442695
    %v330 = vpow.pop %v329
    %v331 = vmul.f32 %v328, 1.442695
    %v332 = vpow.pop %v331
    %v333 = vadd.f32 %v330, 1.0
    %v334 = vadd.f32 %v332, 1.0
    %v335 = vrcp.pop %v333
    %v336 = vmul.f32 %v333, %v335
    %v337 = vsub.f32 1.0, %v336
    %v338 = vmul.f32 %v335, %v337
    %v339 = vadd.f32 %v335, %v338
    %vm340 = vweird.f32 %v333
    %vm341 = vweird.f32 %v335
    %vm342 = vmor %vm340, %vm341
    %v343 = vsel %vm342, %v335, %v339
    %v344 = vand.u32 2147483647, %v333
    %vm345 = vcmp.eq.f32.partialorder %v344, 8.507059e+37
    %v346 = vand.u32 %v333, 2147483648
    %v347 = vor.u32 1.1754944e-38, %v346
    %v348 = vsel %vm345, %v347, %v343
    %v349 = vmul.f32 1.0, %v348
    %v350 = vrcp.pop %v334
    %v351 = vmul.f32 %v334, %v350
    %v352 = vsub.f32 1.0, %v351
    %v353 = vmul.f32 %v350, %v352
    %v354 = vadd.f32 %v350, %v353
    %vm355 = vweird.f32 %v334
    %vm356 = vweird.f32 %v350
    %vm357 = vmor %vm355, %vm356
    %v358 = vsel %vm357, %v350, %v354
    %v359 = vand.u32 2147483647, %v334
    %vm360 = vcmp.eq.f32.partialorder %v359, 8.507059e+37
    %v361 = vand.u32 %v334, 2147483648
    %v362 = vor.u32 1.1754944e-38, %v361
    %v363 = vsel %vm360, %v362, %v358
    %v364 = vmul.f32 1.0, %v363
    %v365 = vxor.u32 %v320, 2147483648
    %v366 = vxor.u32 %v324, 2147483648
    %v367 = vmul.f32 %v365, 1.442695
    %v368 = vpow.pop %v367
    %v369 = vmul.f32 %v366, 1.442695
    %v370 = vpow.pop %v369
    %v371 = vadd.f32 %v368, 1.0
    %v372 = vadd.f32 %v370, 1.0
    %v373 = vrcp.pop %v371
    %v374 = vmul.f32 %v371, %v373
    %v375 = vsub.f32 1.0, %v374
    %v376 = vmul.f32 %v373, %v375
    %v377 = vadd.f32 %v373, %v376
    %vm378 = vweird.f32 %v371
    %vm379 = vweird.f32 %v373
    %vm380 = vmor %vm378, %vm379
    %v381 = vsel %vm380, %v373, %v377
    %v382 = vand.u32 2147483647, %v371
    %vm383 = vcmp.eq.f32.partialorder %v382, 8.507059e+37
    %v384 = vand.u32 %v371, 2147483648
    %v385 = vor.u32 1.1754944e-38, %v384
    %v386 = vsel %vm383, %v385, %v381
    %v387 = vmul.f32 1.0, %v386
    %v388 = vrcp.pop %v372
    %v389 = vmul.f32 %v372, %v388
    %v390 = vsub.f32 1.0, %v389
    %v391 = vmul.f32 %v388, %v390
    %v392 = vadd.f32 %v388, %v391
    %vm393 = vweird.f32 %v372
    %vm394 = vweird.f32 %v388
    %vm395 = vmor %vm393, %vm394
    %v396 = vsel %vm395, %v388, %v392
    %v397 = vand.u32 2147483647, %v372
    %vm398 = vcmp.eq.f32.partialorder %v397, 8.507059e+37
    %v399 = vand.u32 %v372, 2147483648
    %v400 = vor.u32 1.1754944e-38, %v399
    %v401 = vsel %vm398, %v400, %v396
    %v402 = vmul.f32 1.0, %v401
    %v403 = vtanh.pop %v321
    %v404 = vtanh.pop %v325
    %v405 = vxor.u32 %v322, 2147483648
    %v406 = vxor.u32 %v326, 2147483648
    %v407 = vmul.f32 %v405, 1.442695
    %v408 = vpow.pop %v407
    %v409 = vmul.f32 %v406, 1.442695
    %v410 = vpow.pop %v409
    %v411 = vadd.f32 %v408, 1.0
    %v412 = vadd.f32 %v410, 1.0
    %v413 = vrcp.pop %v411
    %v414 = vmul.f32 %v411, %v413
    %v415 = vsub.f32 1.0, %v414
    %v416 = vmul.f32 %v413, %v415
    %v417 = vadd.f32 %v413, %v416
    %vm418 = vweird.f32 %v411
    %vm419 = vweird.f32 %v413
    %vm420 = vmor %vm418, %vm419
    %v421 = vsel %vm420, %v413, %v417
    %v422 = vand.u32 2147483647, %v411
    %vm423 = vcmp.eq.f32.partialorder %v422, 8.507059e+37
    %v424 = vand.u32 %v411, 2147483648
    %v425 = vor.u32 1.1754944e-38, %v424
    %v426 = vsel %vm423, %v425, %v421
    %v427 = vmul.f32 1.0, %v426
    %v428 = vrcp.pop %v412
    %v429 = vmul.f32 %v412, %v428
    %v430 = vsub.f32 1.0, %v429
    %v431 = vmul.f32 %v428, %v430
    %v432 = vadd.f32 %v428, %v431
    %vm433 = vweird.f32 %v412
    %vm434 = vweird.f32 %v428
    %vm435 = vmor %vm433, %vm434
    %v436 = vsel %vm435, %v428, %v432
    %v437 = vand.u32 2147483647, %v412
    %vm438 = vcmp.eq.f32.partialorder %v437, 8.507059e+37
    %v439 = vand.u32 %v412, 2147483648
    %v440 = vor.u32 1.1754944e-38, %v439
    %v441 = vsel %vm438, %v440, %v436
    %v442 = vmul.f32 1.0, %v441
    %v443 = vmul.f32 %v387, %v88
    %v444 = vmul.f32 %v402, %v89
    %v445 = vmul.f32 %v349, %v403
    %v446 = vmul.f32 %v364, %v404
    %v447 = vadd.f32 %v443, %v445
    %v448 = vadd.f32 %v444, %v446
    %v449 = vtanh.pop %v447
    %v450 = vtanh.pop %v448
    %v451 = vmul.f32 %v427, %v449
    %v452 = vmul.f32 %v442, %v450
    %s453 = scalar_lea.vmem [#allocation5], 32
    %v454 = vld [vmem:[%s453] sm:$0xff]
    %v455 = vld [vmem:[%s453 + $0x8] sm:$0xff]
    %v456 = vld [vmem:[%s453 + $0x10] sm:$0xff]
    %v457 = vld [vmem:[%s453 + $0x18] sm:$0xff]
    %v458 = vunpack.c.l.bf16 %v454
    %v459 = vunpack.c.h.bf16 %v454
    %v460 = vunpack.c.l.bf16 %v455
    %v461 = vunpack.c.h.bf16 %v455
    %v462 = vunpack.c.l.bf16 %v456
    %v463 = vunpack.c.h.bf16 %v456
    %v464 = vunpack.c.l.bf16 %v457
    %v465 = vunpack.c.h.bf16 %v457
    %v466 = vpack.c.bf16 %v452, %v451
    %467 = vmatpush.bf16.msra.mxu0 %v227
    %468 = vmatpush.bf16.msra.mxu0 %v223
    %469 = vmatpush.bf16.msra.mxu0 %v219
    %470 = vmatpush.bf16.msra.mxu0 %v215
    %471 = vmatpush.bf16.msra.mxu0 %v211
    %472 = vmatpush.bf16.msra.mxu0 %v207
    %473 = vmatpush.bf16.msra.mxu0 %v203
    %474 = vmatpush.bf16.msra.mxu0 %v199
    %475 = vmatmul.bf16.gmra.mxu0 %v466
    %v476 = vpop.f32.mrf.mxu0
    %v477 = vadd.f32 0.0, %v476
    %v478 = vpop.f32.mrf.mxu0
    %v479 = vadd.f32 0.0, %v478
    %480 = vdwg.mxu0
    %481 = vmatpush.bf16.msra.mxu0 %v228
    %482 = vmatpush.bf16.msra.mxu0 %v224
    %483 = vmatpush.bf16.msra.mxu0 %v220
    %484 = vmatpush.bf16.msra.mxu0 %v216
    %485 = vmatpush.bf16.msra.mxu0 %v212
    %486 = vmatpush.bf16.msra.mxu0 %v208
    %487 = vmatpush.bf16.msra.mxu0 %v204
    %488 = vmatpush.bf16.msra.mxu0 %v200
    %489 = vmatmul.bf16.gmra.mxu0 %v466
    %v490 = vpop.f32.mrf.mxu0
    %v491 = vadd.f32 0.0, %v490
    %v492 = vpop.f32.mrf.mxu0
    %v493 = vadd.f32 0.0, %v492
    %494 = vdwg.mxu0
    %495 = vmatpush.bf16.msra.mxu0 %v229
    %496 = vmatpush.bf16.msra.mxu0 %v225
    %497 = vmatpush.bf16.msra.mxu0 %v221
    %498 = vmatpush.bf16.msra.mxu0 %v217
    %499 = vmatpush.bf16.msra.mxu0 %v213
    %500 = vmatpush.bf16.msra.mxu0 %v209
    %501 = vmatpush.bf16.msra.mxu0 %v205
    %502 = vmatpush.bf16.msra.mxu0 %v201
    %503 = vmatmul.bf16.gmra.mxu0 %v466
    %v504 = vpop.f32.mrf.mxu0
    %v505 = vadd.f32 0.0, %v504
    %v506 = vpop.f32.mrf.mxu0
    %v507 = vadd.f32 0.0, %v506
    %508 = vdwg.mxu0
    %509 = vmatpush.bf16.msra.mxu0 %v230
    %510 = vmatpush.bf16.msra.mxu0 %v226
    %511 = vmatpush.bf16.msra.mxu0 %v222
    %512 = vmatpush.bf16.msra.mxu0 %v218
    %513 = vmatpush.bf16.msra.mxu0 %v214
    %514 = vmatpush.bf16.msra.mxu0 %v210
    %515 = vmatpush.bf16.msra.mxu0 %v206
    %516 = vmatpush.bf16.msra.mxu0 %v202
    %517 = vmatmul.bf16.gmra.mxu0 %v466
    %v518 = vpop.f32.mrf.mxu0
    %v519 = vadd.f32 0.0, %v518
    %v520 = vpop.f32.mrf.mxu0
    %v521 = vadd.f32 0.0, %v520
    %522 = vdwg.mxu0
    %v523 = vadd.f32 %v458, %v477
    %v524 = vadd.f32 %v459, %v491
    %v525 = vadd.f32 %v460, %v505
    %v526 = vadd.f32 %v461, %v519
    %v527 = vadd.f32 %v462, %v479
    %v528 = vadd.f32 %v463, %v493
    %v529 = vadd.f32 %v464, %v507
    %v530 = vadd.f32 %v465, %v521
    %v531 = vxor.u32 %v523, 2147483648
    %v532 = vxor.u32 %v527, 2147483648
    %v533 = vmul.f32 %v531, 1.442695
    %v534 = vpow.pop %v533
    %v535 = vmul.f32 %v532, 1.442695
    %v536 = vpow.pop %v535
    %v537 = vadd.f32 %v534, 1.0
    %v538 = vadd.f32 %v536, 1.0
    %v539 = vrcp.pop %v537
    %v540 = vmul.f32 %v537, %v539
    %v541 = vsub.f32 1.0, %v540
    %v542 = vmul.f32 %v539, %v541
    %v543 = vadd.f32 %v539, %v542
    %vm544 = vweird.f32 %v537
    %vm545 = vweird.f32 %v539
    %vm546 = vmor %vm544, %vm545
    %v547 = vsel %vm546, %v539, %v543
    %v548 = vand.u32 2147483647, %v537
    %vm549 = vcmp.eq.f32.partialorder %v548, 8.507059e+37
    %v550 = vand.u32 %v537, 2147483648
    %v551 = vor.u32 1.1754944e-38, %v550
    %v552 = vsel %vm549, %v551, %v547
    %v553 = vmul.f32 1.0, %v552
    %v554 = vrcp.pop %v538
    %v555 = vmul.f32 %v538, %v554
    %v556 = vsub.f32 1.0, %v555
    %v557 = vmul.f32 %v554, %v556
    %v558 = vadd.f32 %v554, %v557
    %vm559 = vweird.f32 %v538
    %vm560 = vweird.f32 %v554
    %vm561 = vmor %vm559, %vm560
    %v562 = vsel %vm561, %v554, %v558
    %v563 = vand.u32 2147483647, %v538
    %vm564 = vcmp.eq.f32.partialorder %v563, 8.507059e+37
    %v565 = vand.u32 %v538, 2147483648
    %v566 = vor.u32 1.1754944e-38, %v565
    %v567 = vsel %vm564, %v566, %v562
    %v568 = vmul.f32 1.0, %v567
    %v569 = vxor.u32 %v524, 2147483648
    %v570 = vxor.u32 %v528, 2147483648
    %v571 = vmul.f32 %v569, 1.442695
    %v572 = vpow.pop %v571
    %v573 = vmul.f32 %v570, 1.442695
    %v574 = vpow.pop %v573
    %v575 = vadd.f32 %v572, 1.0
    %v576 = vadd.f32 %v574, 1.0
    %v577 = vrcp.pop %v575
    %v578 = vmul.f32 %v575, %v577
    %v579 = vsub.f32 1.0, %v578
    %v580 = vmul.f32 %v577, %v579
    %v581 = vadd.f32 %v577, %v580
    %vm582 = vweird.f32 %v575
    %vm583 = vweird.f32 %v577
    %vm584 = vmor %vm582, %vm583
    %v585 = vsel %vm584, %v577, %v581
    %v586 = vand.u32 2147483647, %v575
    %vm587 = vcmp.eq.f32.partialorder %v586, 8.507059e+37
    %v588 = vand.u32 %v575, 2147483648
    %v589 = vor.u32 1.1754944e-38, %v588
    %v590 = vsel %vm587, %v589, %v585
    %v591 = vmul.f32 1.0, %v590
    %v592 = vrcp.pop %v576
    %v593 = vmul.f32 %v576, %v592
    %v594 = vsub.f32 1.0, %v593
    %v595 = vmul.f32 %v592, %v594
    %v596 = vadd.f32 %v592, %v595
    %vm597 = vweird.f32 %v576
    %vm598 = vweird.f32 %v592
    %vm599 = vmor %vm597, %vm598
    %v600 = vsel %vm599, %v592, %v596
    %v601 = vand.u32 2147483647, %v576
    %vm602 = vcmp.eq.f32.partialorder %v601, 8.507059e+37
    %v603 = vand.u32 %v576, 2147483648
    %v604 = vor.u32 1.1754944e-38, %v603
    %v605 = vsel %vm602, %v604, %v600
    %v606 = vmul.f32 1.0, %v605
    %v607 = vtanh.pop %v525
    %v608 = vtanh.pop %v529
    %v609 = vxor.u32 %v526, 2147483648
    %v610 = vxor.u32 %v530, 2147483648
    %v611 = vmul.f32 %v609, 1.442695
    %v612 = vpow.pop %v611
    %v613 = vmul.f32 %v610, 1.442695
    %v614 = vpow.pop %v613
    %v615 = vadd.f32 %v612, 1.0
    %v616 = vadd.f32 %v614, 1.0
    %v617 = vrcp.pop %v615
    %v618 = vmul.f32 %v615, %v617
    %v619 = vsub.f32 1.0, %v618
    %v620 = vmul.f32 %v617, %v619
    %v621 = vadd.f32 %v617, %v620
    %vm622 = vweird.f32 %v615
    %vm623 = vweird.f32 %v617
    %vm624 = vmor %vm622, %vm623
    %v625 = vsel %vm624, %v617, %v621
    %v626 = vand.u32 2147483647, %v615
    %vm627 = vcmp.eq.f32.partialorder %v626, 8.507059e+37
    %v628 = vand.u32 %v615, 2147483648
    %v629 = vor.u32 1.1754944e-38, %v628
    %v630 = vsel %vm627, %v629, %v625
    %v631 = vmul.f32 1.0, %v630
    %v632 = vrcp.pop %v616
    %v633 = vmul.f32 %v616, %v632
    %v634 = vsub.f32 1.0, %v633
    %v635 = vmul.f32 %v632, %v634
    %v636 = vadd.f32 %v632, %v635
    %vm637 = vweird.f32 %v616
    %vm638 = vweird.f32 %v632
    %vm639 = vmor %vm637, %vm638
    %v640 = vsel %vm639, %v632, %v636
    %v641 = vand.u32 2147483647, %v616
    %vm642 = vcmp.eq.f32.partialorder %v641, 8.507059e+37
    %v643 = vand.u32 %v616, 2147483648
    %v644 = vor.u32 1.1754944e-38, %v643
    %v645 = vsel %vm642, %v644, %v640
    %v646 = vmul.f32 1.0, %v645
    %v647 = vmul.f32 %v591, %v447
    %v648 = vmul.f32 %v606, %v448
    %v649 = vmul.f32 %v553, %v607
    %v650 = vmul.f32 %v568, %v608
    %v651 = vadd.f32 %v647, %v649
    %v652 = vadd.f32 %v648, %v650
    %v653 = vtanh.pop %v651
    %v654 = vtanh.pop %v652
    %v655 = vmul.f32 %v631, %v653
    %v656 = vmul.f32 %v646, %v654
    %s657 = scalar_lea.vmem [#allocation5], 64
    %v658 = vld [vmem:[%s657] sm:$0xff]
    %v659 = vld [vmem:[%s657 + $0x8] sm:$0xff]
    %v660 = vld [vmem:[%s657 + $0x10] sm:$0xff]
    %v661 = vld [vmem:[%s657 + $0x18] sm:$0xff]
    %v662 = vunpack.c.l.bf16 %v658
    %v663 = vunpack.c.h.bf16 %v658
    %v664 = vunpack.c.l.bf16 %v659
    %v665 = vunpack.c.h.bf16 %v659
    %v666 = vunpack.c.l.bf16 %v660
    %v667 = vunpack.c.h.bf16 %v660
    %v668 = vunpack.c.l.bf16 %v661
    %v669 = vunpack.c.h.bf16 %v661
    %v670 = vpack.c.bf16 %v656, %v655
    %671 = vmatpush.bf16.msra.mxu0 %v227
    %672 = vmatpush.bf16.msra.mxu0 %v223
    %673 = vmatpush.bf16.msra.mxu0 %v219
    %674 = vmatpush.bf16.msra.mxu0 %v215
    %675 = vmatpush.bf16.msra.mxu0 %v211
    %676 = vmatpush.bf16.msra.mxu0 %v207
    %677 = vmatpush.bf16.msra.mxu0 %v203
    %678 = vmatpush.bf16.msra.mxu0 %v199
    %679 = vmatmul.bf16.gmra.mxu0 %v670
    %v680 = vpop.f32.mrf.mxu0
    %v681 = vadd.f32 0.0, %v680
    %v682 = vpop.f32.mrf.mxu0
    %v683 = vadd.f32 0.0, %v682
    %684 = vdwg.mxu0
    %685 = vmatpush.bf16.msra.mxu0 %v228
    %686 = vmatpush.bf16.msra.mxu0 %v224
    %687 = vmatpush.bf16.msra.mxu0 %v220
    %688 = vmatpush.bf16.msra.mxu0 %v216
    %689 = vmatpush.bf16.msra.mxu0 %v212
    %690 = vmatpush.bf16.msra.mxu0 %v208
    %691 = vmatpush.bf16.msra.mxu0 %v204
    %692 = vmatpush.bf16.msra.mxu0 %v200
    %693 = vmatmul.bf16.gmra.mxu0 %v670
    %v694 = vpop.f32.mrf.mxu0
    %v695 = vadd.f32 0.0, %v694
    %v696 = vpop.f32.mrf.mxu0
    %v697 = vadd.f32 0.0, %v696
    %698 = vdwg.mxu0
    %699 = vmatpush.bf16.msra.mxu0 %v229
    %700 = vmatpush.bf16.msra.mxu0 %v225
    %701 = vmatpush.bf16.msra.mxu0 %v221
    %702 = vmatpush.bf16.msra.mxu0 %v217
    %703 = vmatpush.bf16.msra.mxu0 %v213
    %704 = vmatpush.bf16.msra.mxu0 %v209
    %705 = vmatpush.bf16.msra.mxu0 %v205
    %706 = vmatpush.bf16.msra.mxu0 %v201
    %707 = vmatmul.bf16.gmra.mxu0 %v670
    %v708 = vpop.f32.mrf.mxu0
    %v709 = vadd.f32 0.0, %v708
    %v710 = vpop.f32.mrf.mxu0
    %v711 = vadd.f32 0.0, %v710
    %712 = vdwg.mxu0
    %713 = vmatpush.bf16.msra.mxu0 %v230
    %714 = vmatpush.bf16.msra.mxu0 %v226
    %715 = vmatpush.bf16.msra.mxu0 %v222
    %716 = vmatpush.bf16.msra.mxu0 %v218
    %717 = vmatpush.bf16.msra.mxu0 %v214
    %718 = vmatpush.bf16.msra.mxu0 %v210
    %719 = vmatpush.bf16.msra.mxu0 %v206
    %720 = vmatpush.bf16.msra.mxu0 %v202
    %721 = vmatmul.bf16.gmra.mxu0 %v670
    %v722 = vpop.f32.mrf.mxu0
    %v723 = vadd.f32 0.0, %v722
    %v724 = vpop.f32.mrf.mxu0
    %v725 = vadd.f32 0.0, %v724
    %726 = vdwg.mxu0
    %v727 = vadd.f32 %v662, %v681
    %v728 = vadd.f32 %v663, %v695
    %v729 = vadd.f32 %v664, %v709
    %v730 = vadd.f32 %v665, %v723
    %v731 = vadd.f32 %v666, %v683
    %v732 = vadd.f32 %v667, %v697
    %v733 = vadd.f32 %v668, %v711
    %v734 = vadd.f32 %v669, %v725
    %v735 = vxor.u32 %v727, 2147483648
    %v736 = vxor.u32 %v731, 2147483648
    %v737 = vmul.f32 %v735, 1.442695
    %v738 = vpow.pop %v737
    %v739 = vmul.f32 %v736, 1.442695
    %v740 = vpow.pop %v739
    %v741 = vadd.f32 %v738, 1.0
    %v742 = vadd.f32 %v740, 1.0
    %v743 = vrcp.pop %v741
    %v744 = vmul.f32 %v741, %v743
    %v745 = vsub.f32 1.0, %v744
    %v746 = vmul.f32 %v743, %v745
    %v747 = vadd.f32 %v743, %v746
    %vm748 = vweird.f32 %v741
    %vm749 = vweird.f32 %v743
    %vm750 = vmor %vm748, %vm749
    %v751 = vsel %vm750, %v743, %v747
    %v752 = vand.u32 2147483647, %v741
    %vm753 = vcmp.eq.f32.partialorder %v752, 8.507059e+37
    %v754 = vand.u32 %v741, 2147483648
    %v755 = vor.u32 1.1754944e-38, %v754
    %v756 = vsel %vm753, %v755, %v751
    %v757 = vmul.f32 1.0, %v756
    %v758 = vrcp.pop %v742
    %v759 = vmul.f32 %v742, %v758
    %v760 = vsub.f32 1.0, %v759
    %v761 = vmul.f32 %v758, %v760
    %v762 = vadd.f32 %v758, %v761
    %vm763 = vweird.f32 %v742
    %vm764 = vweird.f32 %v758
    %vm765 = vmor %vm763, %vm764
    %v766 = vsel %vm765, %v758, %v762
    %v767 = vand.u32 2147483647, %v742
    %vm768 = vcmp.eq.f32.partialorder %v767, 8.507059e+37
    %v769 = vand.u32 %v742, 2147483648
    %v770 = vor.u32 1.1754944e-38, %v769
    %v771 = vsel %vm768, %v770, %v766
    %v772 = vmul.f32 1.0, %v771
    %v773 = vxor.u32 %v728, 2147483648
    %v774 = vxor.u32 %v732, 2147483648
    %v775 = vmul.f32 %v773, 1.442695
    %v776 = vpow.pop %v775
    %v777 = vmul.f32 %v774, 1.442695
    %v778 = vpow.pop %v777
    %v779 = vadd.f32 %v776, 1.0
    %v780 = vadd.f32 %v778, 1.0
    %v781 = vrcp.pop %v779
    %v782 = vmul.f32 %v779, %v781
    %v783 = vsub.f32 1.0, %v782
    %v784 = vmul.f32 %v781, %v783
    %v785 = vadd.f32 %v781, %v784
    %vm786 = vweird.f32 %v779
    %vm787 = vweird.f32 %v781
    %vm788 = vmor %vm786, %vm787
    %v789 = vsel %vm788, %v781, %v785
    %v790 = vand.u32 2147483647, %v779
    %vm791 = vcmp.eq.f32.partialorder %v790, 8.507059e+37
    %v792 = vand.u32 %v779, 2147483648
    %v793 = vor.u32 1.1754944e-38, %v792
    %v794 = vsel %vm791, %v793, %v789
    %v795 = vmul.f32 1.0, %v794
    %v796 = vrcp.pop %v780
    %v797 = vmul.f32 %v780, %v796
    %v798 = vsub.f32 1.0, %v797
    %v799 = vmul.f32 %v796, %v798
    %v800 = vadd.f32 %v796, %v799
    %vm801 = vweird.f32 %v780
    %vm802 = vweird.f32 %v796
    %vm803 = vmor %vm801, %vm802
    %v804 = vsel %vm803, %v796, %v800
    %v805 = vand.u32 2147483647, %v780
    %vm806 = vcmp.eq.f32.partialorder %v805, 8.507059e+37
    %v807 = vand.u32 %v780, 2147483648
    %v808 = vor.u32 1.1754944e-38, %v807
    %v809 = vsel %vm806, %v808, %v804
    %v810 = vmul.f32 1.0, %v809
    %v811 = vtanh.pop %v729
    %v812 = vtanh.pop %v733
    %v813 = vxor.u32 %v730, 2147483648
    %v814 = vxor.u32 %v734, 2147483648
    %v815 = vmul.f32 %v813, 1.442695
    %v816 = vpow.pop %v815
    %v817 = vmul.f32 %v814, 1.442695
    %v818 = vpow.pop %v817
    %v819 = vadd.f32 %v816, 1.0
    %v820 = vadd.f32 %v818, 1.0
    %v821 = vrcp.pop %v819
    %v822 = vmul.f32 %v819, %v821
    %v823 = vsub.f32 1.0, %v822
    %v824 = vmul.f32 %v821, %v823
    %v825 = vadd.f32 %v821, %v824
    %vm826 = vweird.f32 %v819
    %vm827 = vweird.f32 %v821
    %vm828 = vmor %vm826, %vm827
    %v829 = vsel %vm828, %v821, %v825
    %v830 = vand.u32 2147483647, %v819
    %vm831 = vcmp.eq.f32.partialorder %v830, 8.507059e+37
    %v832 = vand.u32 %v819, 2147483648
    %v833 = vor.u32 1.1754944e-38, %v832
    %v834 = vsel %vm831, %v833, %v829
    %v835 = vmul.f32 1.0, %v834
    %v836 = vrcp.pop %v820
    %v837 = vmul.f32 %v820, %v836
    %v838 = vsub.f32 1.0, %v837
    %v839 = vmul.f32 %v836, %v838
    %v840 = vadd.f32 %v836, %v839
    %vm841 = vweird.f32 %v820
    %vm842 = vweird.f32 %v836
    %vm843 = vmor %vm841, %vm842
    %v844 = vsel %vm843, %v836, %v840
    %v845 = vand.u32 2147483647, %v820
    %vm846 = vcmp.eq.f32.partialorder %v845, 8.507059e+37
    %v847 = vand.u32 %v820, 2147483648
    %v848 = vor.u32 1.1754944e-38, %v847
    %v849 = vsel %vm846, %v848, %v844
    %v850 = vmul.f32 1.0, %v849
    %v851 = vmul.f32 %v795, %v651
    %v852 = vmul.f32 %v810, %v652
    %v853 = vmul.f32 %v757, %v811
    %v854 = vmul.f32 %v772, %v812
    %v855 = vadd.f32 %v851, %v853
    %v856 = vadd.f32 %v852, %v854
    %v857 = vtanh.pop %v855
    %v858 = vtanh.pop %v856
    %v859 = vmul.f32 %v835, %v857
    %v860 = vmul.f32 %v850, %v858
    %s861 = scalar_lea.vmem [#allocation5], 96
    %v862 = vld [vmem:[%s861] sm:$0xff]
    %v863 = vld [vmem:[%s861 + $0x8] sm:$0xff]
    %v864 = vld [vmem:[%s861 + $0x10] sm:$0xff]
    %v865 = vld [vmem:[%s861 + $0x18] sm:$0xff]
    %v866 = vunpack.c.l.bf16 %v862
    %v867 = vunpack.c.h.bf16 %v862
    %v868 = vunpack.c.l.bf16 %v863
    %v869 = vunpack.c.h.bf16 %v863
    %v870 = vunpack.c.l.bf16 %v864
    %v871 = vunpack.c.h.bf16 %v864
    %v872 = vunpack.c.l.bf16 %v865
    %v873 = vunpack.c.h.bf16 %v865
    %v874 = vpack.c.bf16 %v860, %v859
    %875 = vmatpush.bf16.msra.mxu0 %v227
    %876 = vmatpush.bf16.msra.mxu0 %v223
    %877 = vmatpush.bf16.msra.mxu0 %v219
    %878 = vmatpush.bf16.msra.mxu0 %v215
    %879 = vmatpush.bf16.msra.mxu0 %v211
    %880 = vmatpush.bf16.msra.mxu0 %v207
    %881 = vmatpush.bf16.msra.mxu0 %v203
    %882 = vmatpush.bf16.msra.mxu0 %v199
    %883 = vmatmul.bf16.gmra.mxu0 %v874
    %v884 = vpop.f32.mrf.mxu0
    %v885 = vadd.f32 0.0, %v884
    %v886 = vpop.f32.mrf.mxu0
    %v887 = vadd.f32 0.0, %v886
    %888 = vdwg.mxu0
    %889 = vmatpush.bf16.msra.mxu0 %v228
    %890 = vmatpush.bf16.msra.mxu0 %v224
    %891 = vmatpush.bf16.msra.mxu0 %v220
    %892 = vmatpush.bf16.msra.mxu0 %v216
    %893 = vmatpush.bf16.msra.mxu0 %v212
    %894 = vmatpush.bf16.msra.mxu0 %v208
    %895 = vmatpush.bf16.msra.mxu0 %v204
    %896 = vmatpush.bf16.msra.mxu0 %v200
    %897 = vmatmul.bf16.gmra.mxu0 %v874
    %v898 = vpop.f32.mrf.mxu0
    %v899 = vadd.f32 0.0, %v898
    %v900 = vpop.f32.mrf.mxu0
    %v901 = vadd.f32 0.0, %v900
    %902 = vdwg.mxu0
    %903 = vmatpush.bf16.msra.mxu0 %v229
    %904 = vmatpush.bf16.msra.mxu0 %v225
    %905 = vmatpush.bf16.msra.mxu0 %v221
    %906 = vmatpush.bf16.msra.mxu0 %v217
    %907 = vmatpush.bf16.msra.mxu0 %v213
    %908 = vmatpush.bf16.msra.mxu0 %v209
    %909 = vmatpush.bf16.msra.mxu0 %v205
    %910 = vmatpush.bf16.msra.mxu0 %v201
    %911 = vmatmul.bf16.gmra.mxu0 %v874
    %v912 = vpop.f32.mrf.mxu0
    %v913 = vadd.f32 0.0, %v912
    %v914 = vpop.f32.mrf.mxu0
    %v915 = vadd.f32 0.0, %v914
    %916 = vdwg.mxu0
    %917 = vmatpush.bf16.msra.mxu0 %v230
    %918 = vmatpush.bf16.msra.mxu0 %v226
    %919 = vmatpush.bf16.msra.mxu0 %v222
    %920 = vmatpush.bf16.msra.mxu0 %v218
    %921 = vmatpush.bf16.msra.mxu0 %v214
    %922 = vmatpush.bf16.msra.mxu0 %v210
    %923 = vmatpush.bf16.msra.mxu0 %v206
    %924 = vmatpush.bf16.msra.mxu0 %v202
    %925 = vmatmul.bf16.gmra.mxu0 %v874
    %v926 = vpop.f32.mrf.mxu0
    %v927 = vadd.f32 0.0, %v926
    %v928 = vpop.f32.mrf.mxu0
    %v929 = vadd.f32 0.0, %v928
    %930 = vdwg.mxu0
    %v931 = vadd.f32 %v866, %v885
    %v932 = vadd.f32 %v867, %v899
    %v933 = vadd.f32 %v868, %v913
    %v934 = vadd.f32 %v869, %v927
    %v935 = vadd.f32 %v870, %v887
    %v936 = vadd.f32 %v871, %v901
    %v937 = vadd.f32 %v872, %v915
    %v938 = vadd.f32 %v873, %v929
    %v939 = vxor.u32 %v931, 2147483648
    %v940 = vxor.u32 %v935, 2147483648
    %v941 = vmul.f32 %v939, 1.442695
    %v942 = vpow.pop %v941
    %v943 = vmul.f32 %v940, 1.442695
    %v944 = vpow.pop %v943
    %v945 = vadd.f32 %v942, 1.0
    %v946 = vadd.f32 %v944, 1.0
    %v947 = vrcp.pop %v945
    %v948 = vmul.f32 %v945, %v947
    %v949 = vsub.f32 1.0, %v948
    %v950 = vmul.f32 %v947, %v949
    %v951 = vadd.f32 %v947, %v950
    %vm952 = vweird.f32 %v945
    %vm953 = vweird.f32 %v947
    %vm954 = vmor %vm952, %vm953
    %v955 = vsel %vm954, %v947, %v951
    %v956 = vand.u32 2147483647, %v945
    %vm957 = vcmp.eq.f32.partialorder %v956, 8.507059e+37
    %v958 = vand.u32 %v945, 2147483648
    %v959 = vor.u32 1.1754944e-38, %v958
    %v960 = vsel %vm957, %v959, %v955
    %v961 = vmul.f32 1.0, %v960
    %v962 = vrcp.pop %v946
    %v963 = vmul.f32 %v946, %v962
    %v964 = vsub.f32 1.0, %v963
    %v965 = vmul.f32 %v962, %v964
    %v966 = vadd.f32 %v962, %v965
    %vm967 = vweird.f32 %v946
    %vm968 = vweird.f32 %v962
    %vm969 = vmor %vm967, %vm968
    %v970 = vsel %vm969, %v962, %v966
    %v971 = vand.u32 2147483647, %v946
    %vm972 = vcmp.eq.f32.partialorder %v971, 8.507059e+37
    %v973 = vand.u32 %v946, 2147483648
    %v974 = vor.u32 1.1754944e-38, %v973
    %v975 = vsel %vm972, %v974, %v970
    %v976 = vmul.f32 1.0, %v975
    %v977 = vxor.u32 %v932, 2147483648
    %v978 = vxor.u32 %v936, 2147483648
    %v979 = vmul.f32 %v977, 1.442695
    %v980 = vpow.pop %v979
    %v981 = vmul.f32 %v978, 1.442695
    %v982 = vpow.pop %v981
    %v983 = vadd.f32 %v980, 1.0
    %v984 = vadd.f32 %v982, 1.0
    %v985 = vrcp.pop %v983
    %v986 = vmul.f32 %v983, %v985
    %v987 = vsub.f32 1.0, %v986
    %v988 = vmul.f32 %v985, %v987
    %v989 = vadd.f32 %v985, %v988
    %vm990 = vweird.f32 %v983
    %vm991 = vweird.f32 %v985
    %vm992 = vmor %vm990, %vm991
    %v993 = vsel %vm992, %v985, %v989
    %v994 = vand.u32 2147483647, %v983
    %vm995 = vcmp.eq.f32.partialorder %v994, 8.507059e+37
    %v996 = vand.u32 %v983, 2147483648
    %v997 = vor.u32 1.1754944e-38, %v996
    %v998 = vsel %vm995, %v997, %v993
    %v999 = vmul.f32 1.0, %v998
    %v1000 = vrcp.pop %v984
    %v1001 = vmul.f32 %v984, %v1000
    %v1002 = vsub.f32 1.0, %v1001
    %v1003 = vmul.f32 %v1000, %v1002
    %v1004 = vadd.f32 %v1000, %v1003
    %vm1005 = vweird.f32 %v984
    %vm1006 = vweird.f32 %v1000
    %vm1007 = vmor %vm1005, %vm1006
    %v1008 = vsel %vm1007, %v1000, %v1004
    %v1009 = vand.u32 2147483647, %v984
    %vm1010 = vcmp.eq.f32.partialorder %v1009, 8.507059e+37
    %v1011 = vand.u32 %v984, 2147483648
    %v1012 = vor.u32 1.1754944e-38, %v1011
    %v1013 = vsel %vm1010, %v1012, %v1008
    %v1014 = vmul.f32 1.0, %v1013
    %v1015 = vtanh.pop %v933
    %v1016 = vtanh.pop %v937
    %v1017 = vxor.u32 %v934, 2147483648
    %v1018 = vxor.u32 %v938, 2147483648
    %v1019 = vmul.f32 %v1017, 1.442695
    %v1020 = vpow.pop %v1019
    %v1021 = vmul.f32 %v1018, 1.442695
    %v1022 = vpow.pop %v1021
    %v1023 = vadd.f32 %v1020, 1.0
    %v1024 = vadd.f32 %v1022, 1.0
    %v1025 = vrcp.pop %v1023
    %v1026 = vmul.f32 %v1023, %v1025
    %v1027 = vsub.f32 1.0, %v1026
    %v1028 = vmul.f32 %v1025, %v1027
    %v1029 = vadd.f32 %v1025, %v1028
    %vm1030 = vweird.f32 %v1023
    %vm1031 = vweird.f32 %v1025
    %vm1032 = vmor %vm1030, %vm1031
    %v1033 = vsel %vm1032, %v1025, %v1029
    %v1034 = vand.u32 2147483647, %v1023
    %vm1035 = vcmp.eq.f32.partialorder %v1034, 8.507059e+37
    %v1036 = vand.u32 %v1023, 2147483648
    %v1037 = vor.u32 1.1754944e-38, %v1036
    %v1038 = vsel %vm1035, %v1037, %v1033
    %v1039 = vmul.f32 1.0, %v1038
    %v1040 = vrcp.pop %v1024
    %v1041 = vmul.f32 %v1024, %v1040
    %v1042 = vsub.f32 1.0, %v1041
    %v1043 = vmul.f32 %v1040, %v1042
    %v1044 = vadd.f32 %v1040, %v1043
    %vm1045 = vweird.f32 %v1024
    %vm1046 = vweird.f32 %v1040
    %vm1047 = vmor %vm1045, %vm1046
    %v1048 = vsel %vm1047, %v1040, %v1044
    %v1049 = vand.u32 2147483647, %v1024
    %vm1050 = vcmp.eq.f32.partialorder %v1049, 8.507059e+37
    %v1051 = vand.u32 %v1024, 2147483648
    %v1052 = vor.u32 1.1754944e-38, %v1051
    %v1053 = vsel %vm1050, %v1052, %v1048
    %v1054 = vmul.f32 1.0, %v1053
    %v1055 = vmul.f32 %v999, %v855
    %v1056 = vmul.f32 %v1014, %v856
    %v1057 = vmul.f32 %v961, %v1015
    %v1058 = vmul.f32 %v976, %v1016
    %v1059 = vadd.f32 %v1055, %v1057
    %v1060 = vadd.f32 %v1056, %v1058
    %v1061 = vtanh.pop %v1059
    %v1062 = vtanh.pop %v1060
    %v1063 = vmul.f32 %v1039, %v1061
    %v1064 = vmul.f32 %v1054, %v1062
    %s1065 = scalar_lea.vmem [#allocation5], 128
    %v1066 = vld [vmem:[%s1065] sm:$0xff]
    %v1067 = vld [vmem:[%s1065 + $0x8] sm:$0xff]
    %v1068 = vld [vmem:[%s1065 + $0x10] sm:$0xff]
    %v1069 = vld [vmem:[%s1065 + $0x18] sm:$0xff]
    %v1070 = vunpack.c.l.bf16 %v1066
    %v1071 = vunpack.c.h.bf16 %v1066
    %v1072 = vunpack.c.l.bf16 %v1067
    %v1073 = vunpack.c.h.bf16 %v1067
    %v1074 = vunpack.c.l.bf16 %v1068
    %v1075 = vunpack.c.h.bf16 %v1068
    %v1076 = vunpack.c.l.bf16 %v1069
    %v1077 = vunpack.c.h.bf16 %v1069
    %v1078 = vpack.c.bf16 %v1064, %v1063
    %1079 = vmatpush.bf16.msra.mxu0 %v227
    %1080 = vmatpush.bf16.msra.mxu0 %v223
    %1081 = vmatpush.bf16.msra.mxu0 %v219
    %1082 = vmatpush.bf16.msra.mxu0 %v215
    %1083 = vmatpush.bf16.msra.mxu0 %v211
    %1084 = vmatpush.bf16.msra.mxu0 %v207
    %1085 = vmatpush.bf16.msra.mxu0 %v203
    %1086 = vmatpush.bf16.msra.mxu0 %v199
    %1087 = vmatmul.bf16.gmra.mxu0 %v1078
    %v1088 = vpop.f32.mrf.mxu0
    %v1089 = vadd.f32 0.0, %v1088
    %v1090 = vpop.f32.mrf.mxu0
    %v1091 = vadd.f32 0.0, %v1090
    %1092 = vdwg.mxu0
    %1093 = vmatpush.bf16.msra.mxu0 %v228
    %1094 = vmatpush.bf16.msra.mxu0 %v224
    %1095 = vmatpush.bf16.msra.mxu0 %v220
    %1096 = vmatpush.bf16.msra.mxu0 %v216
    %1097 = vmatpush.bf16.msra.mxu0 %v212
    %1098 = vmatpush.bf16.msra.mxu0 %v208
    %1099 = vmatpush.bf16.msra.mxu0 %v204
    %1100 = vmatpush.bf16.msra.mxu0 %v200
    %1101 = vmatmul.bf16.gmra.mxu0 %v1078
    %v1102 = vpop.f32.mrf.mxu0
    %v1103 = vadd.f32 0.0, %v1102
    %v1104 = vpop.f32.mrf.mxu0
    %v1105 = vadd.f32 0.0, %v1104
    %1106 = vdwg.mxu0
    %1107 = vmatpush.bf16.msra.mxu0 %v229
    %1108 = vmatpush.bf16.msra.mxu0 %v225
    %1109 = vmatpush.bf16.msra.mxu0 %v221
    %1110 = vmatpush.bf16.msra.mxu0 %v217
    %1111 = vmatpush.bf16.msra.mxu0 %v213
    %1112 = vmatpush.bf16.msra.mxu0 %v209
    %1113 = vmatpush.bf16.msra.mxu0 %v205
    %1114 = vmatpush.bf16.msra.mxu0 %v201
    %1115 = vmatmul.bf16.gmra.mxu0 %v1078
    %v1116 = vpop.f32.mrf.mxu0
    %v1117 = vadd.f32 0.0, %v1116
    %v1118 = vpop.f32.mrf.mxu0
    %v1119 = vadd.f32 0.0, %v1118
    %1120 = vdwg.mxu0
    %1121 = vmatpush.bf16.msra.mxu0 %v230
    %1122 = vmatpush.bf16.msra.mxu0 %v226
    %1123 = vmatpush.bf16.msra.mxu0 %v222
    %1124 = vmatpush.bf16.msra.mxu0 %v218
    %1125 = vmatpush.bf16.msra.mxu0 %v214
    %1126 = vmatpush.bf16.msra.mxu0 %v210
    %1127 = vmatpush.bf16.msra.mxu0 %v206
    %1128 = vmatpush.bf16.msra.mxu0 %v202
    %1129 = vmatmul.bf16.gmra.mxu0 %v1078
    %v1130 = vpop.f32.mrf.mxu0
    %v1131 = vadd.f32 0.0, %v1130
    %v1132 = vpop.f32.mrf.mxu0
    %v1133 = vadd.f32 0.0, %v1132
    %1134 = vdwg.mxu0
    %v1135 = vadd.f32 %v1070, %v1089
    %v1136 = vadd.f32 %v1071, %v1103
    %v1137 = vadd.f32 %v1072, %v1117
    %v1138 = vadd.f32 %v1073, %v1131
    %v1139 = vadd.f32 %v1074, %v1091
    %v1140 = vadd.f32 %v1075, %v1105
    %v1141 = vadd.f32 %v1076, %v1119
    %v1142 = vadd.f32 %v1077, %v1133
    %v1143 = vxor.u32 %v1135, 2147483648
    %v1144 = vxor.u32 %v1139, 2147483648
    %v1145 = vmul.f32 %v1143, 1.442695
    %v1146 = vpow.pop %v1145
    %v1147 = vmul.f32 %v1144, 1.442695
    %v1148 = vpow.pop %v1147
    %v1149 = vadd.f32 %v1146, 1.0
    %v1150 = vadd.f32 %v1148, 1.0
    %v1151 = vrcp.pop %v1149
    %v1152 = vmul.f32 %v1149, %v1151
    %v1153 = vsub.f32 1.0, %v1152
    %v1154 = vmul.f32 %v1151, %v1153
    %v1155 = vadd.f32 %v1151, %v1154
    %vm1156 = vweird.f32 %v1149
    %vm1157 = vweird.f32 %v1151
    %vm1158 = vmor %vm1156, %vm1157
    %v1159 = vsel %vm1158, %v1151, %v1155
    %v1160 = vand.u32 2147483647, %v1149
    %vm1161 = vcmp.eq.f32.partialorder %v1160, 8.507059e+37
    %v1162 = vand.u32 %v1149, 2147483648
    %v1163 = vor.u32 1.1754944e-38, %v1162
    %v1164 = vsel %vm1161, %v1163, %v1159
    %v1165 = vmul.f32 1.0, %v1164
    %v1166 = vrcp.pop %v1150
    %v1167 = vmul.f32 %v1150, %v1166
    %v1168 = vsub.f32 1.0, %v1167
    %v1169 = vmul.f32 %v1166, %v1168
    %v1170 = vadd.f32 %v1166, %v1169
    %vm1171 = vweird.f32 %v1150
    %vm1172 = vweird.f32 %v1166
    %vm1173 = vmor %vm1171, %vm1172
    %v1174 = vsel %vm1173, %v1166, %v1170
    %v1175 = vand.u32 2147483647, %v1150
    %vm1176 = vcmp.eq.f32.partialorder %v1175, 8.507059e+37
    %v1177 = vand.u32 %v1150, 2147483648
    %v1178 = vor.u32 1.1754944e-38, %v1177
    %v1179 = vsel %vm1176, %v1178, %v1174
    %v1180 = vmul.f32 1.0, %v1179
    %v1181 = vxor.u32 %v1136, 2147483648
    %v1182 = vxor.u32 %v1140, 2147483648
    %v1183 = vmul.f32 %v1181, 1.442695
    %v1184 = vpow.pop %v1183
    %v1185 = vmul.f32 %v1182, 1.442695
    %v1186 = vpow.pop %v1185
    %v1187 = vadd.f32 %v1184, 1.0
    %v1188 = vadd.f32 %v1186, 1.0
    %v1189 = vrcp.pop %v1187
    %v1190 = vmul.f32 %v1187, %v1189
    %v1191 = vsub.f32 1.0, %v1190
    %v1192 = vmul.f32 %v1189, %v1191
    %v1193 = vadd.f32 %v1189, %v1192
    %vm1194 = vweird.f32 %v1187
    %vm1195 = vweird.f32 %v1189
    %vm1196 = vmor %vm1194, %vm1195
    %v1197 = vsel %vm1196, %v1189, %v1193
    %v1198 = vand.u32 2147483647, %v1187
    %vm1199 = vcmp.eq.f32.partialorder %v1198, 8.507059e+37
    %v1200 = vand.u32 %v1187, 2147483648
    %v1201 = vor.u32 1.1754944e-38, %v1200
    %v1202 = vsel %vm1199, %v1201, %v1197
    %v1203 = vmul.f32 1.0, %v1202
    %v1204 = vrcp.pop %v1188
    %v1205 = vmul.f32 %v1188, %v1204
    %v1206 = vsub.f32 1.0, %v1205
    %v1207 = vmul.f32 %v1204, %v1206
    %v1208 = vadd.f32 %v1204, %v1207
    %vm1209 = vweird.f32 %v1188
    %vm1210 = vweird.f32 %v1204
    %vm1211 = vmor %vm1209, %vm1210
    %v1212 = vsel %vm1211, %v1204, %v1208
    %v1213 = vand.u32 2147483647, %v1188
    %vm1214 = vcmp.eq.f32.partialorder %v1213, 8.507059e+37
    %v1215 = vand.u32 %v1188, 2147483648
    %v1216 = vor.u32 1.1754944e-38, %v1215
    %v1217 = vsel %vm1214, %v1216, %v1212
    %v1218 = vmul.f32 1.0, %v1217
    %v1219 = vtanh.pop %v1137
    %v1220 = vtanh.pop %v1141
    %v1221 = vxor.u32 %v1138, 2147483648
    %v1222 = vxor.u32 %v1142, 2147483648
    %v1223 = vmul.f32 %v1221, 1.442695
    %v1224 = vpow.pop %v1223
    %v1225 = vmul.f32 %v1222, 1.442695
    %v1226 = vpow.pop %v1225
    %v1227 = vadd.f32 %v1224, 1.0
    %v1228 = vadd.f32 %v1226, 1.0
    %v1229 = vrcp.pop %v1227
    %v1230 = vmul.f32 %v1227, %v1229
    %v1231 = vsub.f32 1.0, %v1230
    %v1232 = vmul.f32 %v1229, %v1231
    %v1233 = vadd.f32 %v1229, %v1232
    %vm1234 = vweird.f32 %v1227
    %vm1235 = vweird.f32 %v1229
    %vm1236 = vmor %vm1234, %vm1235
    %v1237 = vsel %vm1236, %v1229, %v1233
    %v1238 = vand.u32 2147483647, %v1227
    %vm1239 = vcmp.eq.f32.partialorder %v1238, 8.507059e+37
    %v1240 = vand.u32 %v1227, 2147483648
    %v1241 = vor.u32 1.1754944e-38, %v1240
    %v1242 = vsel %vm1239, %v1241, %v1237
    %v1243 = vmul.f32 1.0, %v1242
    %v1244 = vrcp.pop %v1228
    %v1245 = vmul.f32 %v1228, %v1244
    %v1246 = vsub.f32 1.0, %v1245
    %v1247 = vmul.f32 %v1244, %v1246
    %v1248 = vadd.f32 %v1244, %v1247
    %vm1249 = vweird.f32 %v1228
    %vm1250 = vweird.f32 %v1244
    %vm1251 = vmor %vm1249, %vm1250
    %v1252 = vsel %vm1251, %v1244, %v1248
    %v1253 = vand.u32 2147483647, %v1228
    %vm1254 = vcmp.eq.f32.partialorder %v1253, 8.507059e+37
    %v1255 = vand.u32 %v1228, 2147483648
    %v1256 = vor.u32 1.1754944e-38, %v1255
    %v1257 = vsel %vm1254, %v1256, %v1252
    %v1258 = vmul.f32 1.0, %v1257
    %v1259 = vmul.f32 %v1203, %v1059
    %v1260 = vmul.f32 %v1218, %v1060
    %v1261 = vmul.f32 %v1165, %v1219
    %v1262 = vmul.f32 %v1180, %v1220
    %v1263 = vadd.f32 %v1259, %v1261
    %v1264 = vadd.f32 %v1260, %v1262
    %v1265 = vtanh.pop %v1263
    %v1266 = vtanh.pop %v1264
    %v1267 = vmul.f32 %v1243, %v1265
    %v1268 = vmul.f32 %v1258, %v1266
    %s1269 = scalar_lea.vmem [#allocation5], 160
    %v1270 = vld [vmem:[%s1269] sm:$0xff]
    %v1271 = vld [vmem:[%s1269 + $0x8] sm:$0xff]
    %v1272 = vld [vmem:[%s1269 + $0x10] sm:$0xff]
    %v1273 = vld [vmem:[%s1269 + $0x18] sm:$0xff]
    %v1274 = vunpack.c.l.bf16 %v1270
    %v1275 = vunpack.c.h.bf16 %v1270
    %v1276 = vunpack.c.l.bf16 %v1271
    %v1277 = vunpack.c.h.bf16 %v1271
    %v1278 = vunpack.c.l.bf16 %v1272
    %v1279 = vunpack.c.h.bf16 %v1272
    %v1280 = vunpack.c.l.bf16 %v1273
    %v1281 = vunpack.c.h.bf16 %v1273
    %v1282 = vpack.c.bf16 %v1268, %v1267
    %1283 = vmatpush.bf16.msra.mxu0 %v227
    %1284 = vmatpush.bf16.msra.mxu0 %v223
    %1285 = vmatpush.bf16.msra.mxu0 %v219
    %1286 = vmatpush.bf16.msra.mxu0 %v215
    %1287 = vmatpush.bf16.msra.mxu0 %v211
    %1288 = vmatpush.bf16.msra.mxu0 %v207
    %1289 = vmatpush.bf16.msra.mxu0 %v203
    %1290 = vmatpush.bf16.msra.mxu0 %v199
    %1291 = vmatmul.bf16.gmra.mxu0 %v1282
    %v1292 = vpop.f32.mrf.mxu0
    %v1293 = vadd.f32 0.0, %v1292
    %v1294 = vpop.f32.mrf.mxu0
    %v1295 = vadd.f32 0.0, %v1294
    %1296 = vdwg.mxu0
    %1297 = vmatpush.bf16.msra.mxu0 %v228
    %1298 = vmatpush.bf16.msra.mxu0 %v224
    %1299 = vmatpush.bf16.msra.mxu0 %v220
    %1300 = vmatpush.bf16.msra.mxu0 %v216
    %1301 = vmatpush.bf16.msra.mxu0 %v212
    %1302 = vmatpush.bf16.msra.mxu0 %v208
    %1303 = vmatpush.bf16.msra.mxu0 %v204
    %1304 = vmatpush.bf16.msra.mxu0 %v200
    %1305 = vmatmul.bf16.gmra.mxu0 %v1282
    %v1306 = vpop.f32.mrf.mxu0
    %v1307 = vadd.f32 0.0, %v1306
    %v1308 = vpop.f32.mrf.mxu0
    %v1309 = vadd.f32 0.0, %v1308
    %1310 = vdwg.mxu0
    %1311 = vmatpush.bf16.msra.mxu0 %v229
    %1312 = vmatpush.bf16.msra.mxu0 %v225
    %1313 = vmatpush.bf16.msra.mxu0 %v221
    %1314 = vmatpush.bf16.msra.mxu0 %v217
    %1315 = vmatpush.bf16.msra.mxu0 %v213
    %1316 = vmatpush.bf16.msra.mxu0 %v209
    %1317 = vmatpush.bf16.msra.mxu0 %v205
    %1318 = vmatpush.bf16.msra.mxu0 %v201
    %1319 = vmatmul.bf16.gmra.mxu0 %v1282
    %v1320 = vpop.f32.mrf.mxu0
    %v1321 = vadd.f32 0.0, %v1320
    %v1322 = vpop.f32.mrf.mxu0
    %v1323 = vadd.f32 0.0, %v1322
    %1324 = vdwg.mxu0
    %1325 = vmatpush.bf16.msra.mxu0 %v230
    %1326 = vmatpush.bf16.msra.mxu0 %v226
    %1327 = vmatpush.bf16.msra.mxu0 %v222
    %1328 = vmatpush.bf16.msra.mxu0 %v218
    %1329 = vmatpush.bf16.msra.mxu0 %v214
    %1330 = vmatpush.bf16.msra.mxu0 %v210
    %1331 = vmatpush.bf16.msra.mxu0 %v206
    %1332 = vmatpush.bf16.msra.mxu0 %v202
    %1333 = vmatmul.bf16.gmra.mxu0 %v1282
    %v1334 = vpop.f32.mrf.mxu0
    %v1335 = vadd.f32 0.0, %v1334
    %v1336 = vpop.f32.mrf.mxu0
    %v1337 = vadd.f32 0.0, %v1336
    %1338 = vdwg.mxu0
    %v1339 = vadd.f32 %v1274, %v1293
    %v1340 = vadd.f32 %v1275, %v1307
    %v1341 = vadd.f32 %v1276, %v1321
    %v1342 = vadd.f32 %v1277, %v1335
    %v1343 = vadd.f32 %v1278, %v1295
    %v1344 = vadd.f32 %v1279, %v1309
    %v1345 = vadd.f32 %v1280, %v1323
    %v1346 = vadd.f32 %v1281, %v1337
    %v1347 = vxor.u32 %v1339, 2147483648
    %v1348 = vxor.u32 %v1343, 2147483648
    %v1349 = vmul.f32 %v1347, 1.442695
    %v1350 = vpow.pop %v1349
    %v1351 = vmul.f32 %v1348, 1.442695
    %v1352 = vpow.pop %v1351
    %v1353 = vadd.f32 %v1350, 1.0
    %v1354 = vadd.f32 %v1352, 1.0
    %v1355 = vrcp.pop %v1353
    %v1356 = vmul.f32 %v1353, %v1355
    %v1357 = vsub.f32 1.0, %v1356
    %v1358 = vmul.f32 %v1355, %v1357
    %v1359 = vadd.f32 %v1355, %v1358
    %vm1360 = vweird.f32 %v1353
    %vm1361 = vweird.f32 %v1355
    %vm1362 = vmor %vm1360, %vm1361
    %v1363 = vsel %vm1362, %v1355, %v1359
    %v1364 = vand.u32 2147483647, %v1353
    %vm1365 = vcmp.eq.f32.partialorder %v1364, 8.507059e+37
    %v1366 = vand.u32 %v1353, 2147483648
    %v1367 = vor.u32 1.1754944e-38, %v1366
    %v1368 = vsel %vm1365, %v1367, %v1363
    %v1369 = vmul.f32 1.0, %v1368
    %v1370 = vrcp.pop %v1354
    %v1371 = vmul.f32 %v1354, %v1370
    %v1372 = vsub.f32 1.0, %v1371
    %v1373 = vmul.f32 %v1370, %v1372
    %v1374 = vadd.f32 %v1370, %v1373
    %vm1375 = vweird.f32 %v1354
    %vm1376 = vweird.f32 %v1370
    %vm1377 = vmor %vm1375, %vm1376
    %v1378 = vsel %vm1377, %v1370, %v1374
    %v1379 = vand.u32 2147483647, %v1354
    %vm1380 = vcmp.eq.f32.partialorder %v1379, 8.507059e+37
    %v1381 = vand.u32 %v1354, 2147483648
    %v1382 = vor.u32 1.1754944e-38, %v1381
    %v1383 = vsel %vm1380, %v1382, %v1378
    %v1384 = vmul.f32 1.0, %v1383
    %v1385 = vxor.u32 %v1340, 2147483648
    %v1386 = vxor.u32 %v1344, 2147483648
    %v1387 = vmul.f32 %v1385, 1.442695
    %v1388 = vpow.pop %v1387
    %v1389 = vmul.f32 %v1386, 1.442695
    %v1390 = vpow.pop %v1389
    %v1391 = vadd.f32 %v1388, 1.0
    %v1392 = vadd.f32 %v1390, 1.0
    %v1393 = vrcp.pop %v1391
    %v1394 = vmul.f32 %v1391, %v1393
    %v1395 = vsub.f32 1.0, %v1394
    %v1396 = vmul.f32 %v1393, %v1395
    %v1397 = vadd.f32 %v1393, %v1396
    %vm1398 = vweird.f32 %v1391
    %vm1399 = vweird.f32 %v1393
    %vm1400 = vmor %vm1398, %vm1399
    %v1401 = vsel %vm1400, %v1393, %v1397
    %v1402 = vand.u32 2147483647, %v1391
    %vm1403 = vcmp.eq.f32.partialorder %v1402, 8.507059e+37
    %v1404 = vand.u32 %v1391, 2147483648
    %v1405 = vor.u32 1.1754944e-38, %v1404
    %v1406 = vsel %vm1403, %v1405, %v1401
    %v1407 = vmul.f32 1.0, %v1406
    %v1408 = vrcp.pop %v1392
    %v1409 = vmul.f32 %v1392, %v1408
    %v1410 = vsub.f32 1.0, %v1409
    %v1411 = vmul.f32 %v1408, %v1410
    %v1412 = vadd.f32 %v1408, %v1411
    %vm1413 = vweird.f32 %v1392
    %vm1414 = vweird.f32 %v1408
    %vm1415 = vmor %vm1413, %vm1414
    %v1416 = vsel %vm1415, %v1408, %v1412
    %v1417 = vand.u32 2147483647, %v1392
    %vm1418 = vcmp.eq.f32.partialorder %v1417, 8.507059e+37
    %v1419 = vand.u32 %v1392, 2147483648
    %v1420 = vor.u32 1.1754944e-38, %v1419
    %v1421 = vsel %vm1418, %v1420, %v1416
    %v1422 = vmul.f32 1.0, %v1421
    %v1423 = vtanh.pop %v1341
    %v1424 = vtanh.pop %v1345
    %v1425 = vxor.u32 %v1342, 2147483648
    %v1426 = vxor.u32 %v1346, 2147483648
    %v1427 = vmul.f32 %v1425, 1.442695
    %v1428 = vpow.pop %v1427
    %v1429 = vmul.f32 %v1426, 1.442695
    %v1430 = vpow.pop %v1429
    %v1431 = vadd.f32 %v1428, 1.0
    %v1432 = vadd.f32 %v1430, 1.0
    %v1433 = vrcp.pop %v1431
    %v1434 = vmul.f32 %v1431, %v1433
    %v1435 = vsub.f32 1.0, %v1434
    %v1436 = vmul.f32 %v1433, %v1435
    %v1437 = vadd.f32 %v1433, %v1436
    %vm1438 = vweird.f32 %v1431
    %vm1439 = vweird.f32 %v1433
    %vm1440 = vmor %vm1438, %vm1439
    %v1441 = vsel %vm1440, %v1433, %v1437
    %v1442 = vand.u32 2147483647, %v1431
    %vm1443 = vcmp.eq.f32.partialorder %v1442, 8.507059e+37
    %v1444 = vand.u32 %v1431, 2147483648
    %v1445 = vor.u32 1.1754944e-38, %v1444
    %v1446 = vsel %vm1443, %v1445, %v1441
    %v1447 = vmul.f32 1.0, %v1446
    %v1448 = vrcp.pop %v1432
    %v1449 = vmul.f32 %v1432, %v1448
    %v1450 = vsub.f32 1.0, %v1449
    %v1451 = vmul.f32 %v1448, %v1450
    %v1452 = vadd.f32 %v1448, %v1451
    %vm1453 = vweird.f32 %v1432
    %vm1454 = vweird.f32 %v1448
    %vm1455 = vmor %vm1453, %vm1454
    %v1456 = vsel %vm1455, %v1448, %v1452
    %v1457 = vand.u32 2147483647, %v1432
    %vm1458 = vcmp.eq.f32.partialorder %v1457, 8.507059e+37
    %v1459 = vand.u32 %v1432, 2147483648
    %v1460 = vor.u32 1.1754944e-38, %v1459
    %v1461 = vsel %vm1458, %v1460, %v1456
    %v1462 = vmul.f32 1.0, %v1461
    %v1463 = vmul.f32 %v1407, %v1263
    %v1464 = vmul.f32 %v1422, %v1264
    %v1465 = vmul.f32 %v1369, %v1423
    %v1466 = vmul.f32 %v1384, %v1424
    %v1467 = vadd.f32 %v1463, %v1465
    %v1468 = vadd.f32 %v1464, %v1466
    %v1469 = vtanh.pop %v1467
    %v1470 = vtanh.pop %v1468
    %v1471 = vmul.f32 %v1447, %v1469
    %v1472 = vmul.f32 %v1462, %v1470
    %s1473 = scalar_lea.vmem [#allocation5], 192
    %v1474 = vld [vmem:[%s1473] sm:$0xff]
    %v1475 = vld [vmem:[%s1473 + $0x8] sm:$0xff]
    %v1476 = vld [vmem:[%s1473 + $0x10] sm:$0xff]
    %v1477 = vld [vmem:[%s1473 + $0x18] sm:$0xff]
    %v1478 = vunpack.c.l.bf16 %v1474
    %v1479 = vunpack.c.h.bf16 %v1474
    %v1480 = vunpack.c.l.bf16 %v1475
    %v1481 = vunpack.c.h.bf16 %v1475
    %v1482 = vunpack.c.l.bf16 %v1476
    %v1483 = vunpack.c.h.bf16 %v1476
    %v1484 = vunpack.c.l.bf16 %v1477
    %v1485 = vunpack.c.h.bf16 %v1477
    %v1486 = vpack.c.bf16 %v1472, %v1471
    %1487 = vmatpush.bf16.msra.mxu0 %v227
    %1488 = vmatpush.bf16.msra.mxu0 %v223
    %1489 = vmatpush.bf16.msra.mxu0 %v219
    %1490 = vmatpush.bf16.msra.mxu0 %v215
    %1491 = vmatpush.bf16.msra.mxu0 %v211
    %1492 = vmatpush.bf16.msra.mxu0 %v207
    %1493 = vmatpush.bf16.msra.mxu0 %v203
    %1494 = vmatpush.bf16.msra.mxu0 %v199
    %1495 = vmatmul.bf16.gmra.mxu0 %v1486
    %v1496 = vpop.f32.mrf.mxu0
    %v1497 = vadd.f32 0.0, %v1496
    %v1498 = vpop.f32.mrf.mxu0
    %v1499 = vadd.f32 0.0, %v1498
    %1500 = vdwg.mxu0
    %1501 = vmatpush.bf16.msra.mxu0 %v228
    %1502 = vmatpush.bf16.msra.mxu0 %v224
    %1503 = vmatpush.bf16.msra.mxu0 %v220
    %1504 = vmatpush.bf16.msra.mxu0 %v216
    %1505 = vmatpush.bf16.msra.mxu0 %v212
    %1506 = vmatpush.bf16.msra.mxu0 %v208
    %1507 = vmatpush.bf16.msra.mxu0 %v204
    %1508 = vmatpush.bf16.msra.mxu0 %v200
    %1509 = vmatmul.bf16.gmra.mxu0 %v1486
    %v1510 = vpop.f32.mrf.mxu0
    %v1511 = vadd.f32 0.0, %v1510
    %v1512 = vpop.f32.mrf.mxu0
    %v1513 = vadd.f32 0.0, %v1512
    %1514 = vdwg.mxu0
    %1515 = vmatpush.bf16.msra.mxu0 %v229
    %1516 = vmatpush.bf16.msra.mxu0 %v225
    %1517 = vmatpush.bf16.msra.mxu0 %v221
    %1518 = vmatpush.bf16.msra.mxu0 %v217
    %1519 = vmatpush.bf16.msra.mxu0 %v213
    %1520 = vmatpush.bf16.msra.mxu0 %v209
    %1521 = vmatpush.bf16.msra.mxu0 %v205
    %1522 = vmatpush.bf16.msra.mxu0 %v201
    %1523 = vmatmul.bf16.gmra.mxu0 %v1486
    %v1524 = vpop.f32.mrf.mxu0
    %v1525 = vadd.f32 0.0, %v1524
    %v1526 = vpop.f32.mrf.mxu0
    %v1527 = vadd.f32 0.0, %v1526
    %1528 = vdwg.mxu0
    %1529 = vmatpush.bf16.msra.mxu0 %v230
    %1530 = vmatpush.bf16.msra.mxu0 %v226
    %1531 = vmatpush.bf16.msra.mxu0 %v222
    %1532 = vmatpush.bf16.msra.mxu0 %v218
    %1533 = vmatpush.bf16.msra.mxu0 %v214
    %1534 = vmatpush.bf16.msra.mxu0 %v210
    %1535 = vmatpush.bf16.msra.mxu0 %v206
    %1536 = vmatpush.bf16.msra.mxu0 %v202
    %1537 = vmatmul.bf16.gmra.mxu0 %v1486
    %v1538 = vpop.f32.mrf.mxu0
    %v1539 = vadd.f32 0.0, %v1538
    %v1540 = vpop.f32.mrf.mxu0
    %v1541 = vadd.f32 0.0, %v1540
    %1542 = vdwg.mxu0
    %v1543 = vadd.f32 %v1478, %v1497
    %v1544 = vadd.f32 %v1479, %v1511
    %v1545 = vadd.f32 %v1480, %v1525
    %v1546 = vadd.f32 %v1481, %v1539
    %v1547 = vadd.f32 %v1482, %v1499
    %v1548 = vadd.f32 %v1483, %v1513
    %v1549 = vadd.f32 %v1484, %v1527
    %v1550 = vadd.f32 %v1485, %v1541
    %v1551 = vxor.u32 %v1543, 2147483648
    %v1552 = vxor.u32 %v1547, 2147483648
    %v1553 = vmul.f32 %v1551, 1.442695
    %v1554 = vpow.pop %v1553
    %v1555 = vmul.f32 %v1552, 1.442695
    %v1556 = vpow.pop %v1555
    %v1557 = vadd.f32 %v1554, 1.0
    %v1558 = vadd.f32 %v1556, 1.0
    %v1559 = vrcp.pop %v1557
    %v1560 = vmul.f32 %v1557, %v1559
    %v1561 = vsub.f32 1.0, %v1560
    %v1562 = vmul.f32 %v1559, %v1561
    %v1563 = vadd.f32 %v1559, %v1562
    %vm1564 = vweird.f32 %v1557
    %vm1565 = vweird.f32 %v1559
    %vm1566 = vmor %vm1564, %vm1565
    %v1567 = vsel %vm1566, %v1559, %v1563
    %v1568 = vand.u32 2147483647, %v1557
    %vm1569 = vcmp.eq.f32.partialorder %v1568, 8.507059e+37
    %v1570 = vand.u32 %v1557, 2147483648
    %v1571 = vor.u32 1.1754944e-38, %v1570
    %v1572 = vsel %vm1569, %v1571, %v1567
    %v1573 = vmul.f32 1.0, %v1572
    %v1574 = vrcp.pop %v1558
    %v1575 = vmul.f32 %v1558, %v1574
    %v1576 = vsub.f32 1.0, %v1575
    %v1577 = vmul.f32 %v1574, %v1576
    %v1578 = vadd.f32 %v1574, %v1577
    %vm1579 = vweird.f32 %v1558
    %vm1580 = vweird.f32 %v1574
    %vm1581 = vmor %vm1579, %vm1580
    %v1582 = vsel %vm1581, %v1574, %v1578
    %v1583 = vand.u32 2147483647, %v1558
    %vm1584 = vcmp.eq.f32.partialorder %v1583, 8.507059e+37
    %v1585 = vand.u32 %v1558, 2147483648
    %v1586 = vor.u32 1.1754944e-38, %v1585
    %v1587 = vsel %vm1584, %v1586, %v1582
    %v1588 = vmul.f32 1.0, %v1587
    %v1589 = vxor.u32 %v1544, 2147483648
    %v1590 = vxor.u32 %v1548, 2147483648
    %v1591 = vmul.f32 %v1589, 1.442695
    %v1592 = vpow.pop %v1591
    %v1593 = vmul.f32 %v1590, 1.442695
    %v1594 = vpow.pop %v1593
    %v1595 = vadd.f32 %v1592, 1.0
    %v1596 = vadd.f32 %v1594, 1.0
    %v1597 = vrcp.pop %v1595
    %v1598 = vmul.f32 %v1595, %v1597
    %v1599 = vsub.f32 1.0, %v1598
    %v1600 = vmul.f32 %v1597, %v1599
    %v1601 = vadd.f32 %v1597, %v1600
    %vm1602 = vweird.f32 %v1595
    %vm1603 = vweird.f32 %v1597
    %vm1604 = vmor %vm1602, %vm1603
    %v1605 = vsel %vm1604, %v1597, %v1601
    %v1606 = vand.u32 2147483647, %v1595
    %vm1607 = vcmp.eq.f32.partialorder %v1606, 8.507059e+37
    %v1608 = vand.u32 %v1595, 2147483648
    %v1609 = vor.u32 1.1754944e-38, %v1608
    %v1610 = vsel %vm1607, %v1609, %v1605
    %v1611 = vmul.f32 1.0, %v1610
    %v1612 = vrcp.pop %v1596
    %v1613 = vmul.f32 %v1596, %v1612
    %v1614 = vsub.f32 1.0, %v1613
    %v1615 = vmul.f32 %v1612, %v1614
    %v1616 = vadd.f32 %v1612, %v1615
    %vm1617 = vweird.f32 %v1596
    %vm1618 = vweird.f32 %v1612
    %vm1619 = vmor %vm1617, %vm1618
    %v1620 = vsel %vm1619, %v1612, %v1616
    %v1621 = vand.u32 2147483647, %v1596
    %vm1622 = vcmp.eq.f32.partialorder %v1621, 8.507059e+37
    %v1623 = vand.u32 %v1596, 2147483648
    %v1624 = vor.u32 1.1754944e-38, %v1623
    %v1625 = vsel %vm1622, %v1624, %v1620
    %v1626 = vmul.f32 1.0, %v1625
    %v1627 = vtanh.pop %v1545
    %v1628 = vtanh.pop %v1549
    %v1629 = vxor.u32 %v1546, 2147483648
    %v1630 = vxor.u32 %v1550, 2147483648
    %v1631 = vmul.f32 %v1629, 1.442695
    %v1632 = vpow.pop %v1631
    %v1633 = vmul.f32 %v1630, 1.442695
    %v1634 = vpow.pop %v1633
    %v1635 = vadd.f32 %v1632, 1.0
    %v1636 = vadd.f32 %v1634, 1.0
    %v1637 = vrcp.pop %v1635
    %v1638 = vmul.f32 %v1635, %v1637
    %v1639 = vsub.f32 1.0, %v1638
    %v1640 = vmul.f32 %v1637, %v1639
    %v1641 = vadd.f32 %v1637, %v1640
    %vm1642 = vweird.f32 %v1635
    %vm1643 = vweird.f32 %v1637
    %vm1644 = vmor %vm1642, %vm1643
    %v1645 = vsel %vm1644, %v1637, %v1641
    %v1646 = vand.u32 2147483647, %v1635
    %vm1647 = vcmp.eq.f32.partialorder %v1646, 8.507059e+37
    %v1648 = vand.u32 %v1635, 2147483648
    %v1649 = vor.u32 1.1754944e-38, %v1648
    %v1650 = vsel %vm1647, %v1649, %v1645
    %v1651 = vmul.f32 1.0, %v1650
    %v1652 = vrcp.pop %v1636
    %v1653 = vmul.f32 %v1636, %v1652
    %v1654 = vsub.f32 1.0, %v1653
    %v1655 = vmul.f32 %v1652, %v1654
    %v1656 = vadd.f32 %v1652, %v1655
    %vm1657 = vweird.f32 %v1636
    %vm1658 = vweird.f32 %v1652
    %vm1659 = vmor %vm1657, %vm1658
    %v1660 = vsel %vm1659, %v1652, %v1656
    %v1661 = vand.u32 2147483647, %v1636
    %vm1662 = vcmp.eq.f32.partialorder %v1661, 8.507059e+37
    %v1663 = vand.u32 %v1636, 2147483648
    %v1664 = vor.u32 1.1754944e-38, %v1663
    %v1665 = vsel %vm1662, %v1664, %v1660
    %v1666 = vmul.f32 1.0, %v1665
    %v1667 = vmul.f32 %v1611, %v1467
    %v1668 = vmul.f32 %v1626, %v1468
    %v1669 = vmul.f32 %v1573, %v1627
    %v1670 = vmul.f32 %v1588, %v1628
    %v1671 = vadd.f32 %v1667, %v1669
    %v1672 = vadd.f32 %v1668, %v1670
    %v1673 = vtanh.pop %v1671
    %v1674 = vtanh.pop %v1672
    %v1675 = vmul.f32 %v1651, %v1673
    %v1676 = vmul.f32 %v1666, %v1674
    %s1677 = scalar_lea.vmem [#allocation5], 224
    %v1678 = vld [vmem:[%s1677] sm:$0xff]
    %v1679 = vld [vmem:[%s1677 + $0x8] sm:$0xff]
    %v1680 = vld [vmem:[%s1677 + $0x10] sm:$0xff]
    %v1681 = vld [vmem:[%s1677 + $0x18] sm:$0xff]
    %v1682 = vunpack.c.l.bf16 %v1678
    %v1683 = vunpack.c.h.bf16 %v1678
    %v1684 = vunpack.c.l.bf16 %v1679
    %v1685 = vunpack.c.h.bf16 %v1679
    %v1686 = vunpack.c.l.bf16 %v1680
    %v1687 = vunpack.c.h.bf16 %v1680
    %v1688 = vunpack.c.l.bf16 %v1681
    %v1689 = vunpack.c.h.bf16 %v1681
    %v1690 = vpack.c.bf16 %v1676, %v1675
    %1691 = vmatpush.bf16.msra.mxu0 %v227
    %1692 = vmatpush.bf16.msra.mxu0 %v223
    %1693 = vmatpush.bf16.msra.mxu0 %v219
    %1694 = vmatpush.bf16.msra.mxu0 %v215
    %1695 = vmatpush.bf16.msra.mxu0 %v211
    %1696 = vmatpush.bf16.msra.mxu0 %v207
    %1697 = vmatpush.bf16.msra.mxu0 %v203
    %1698 = vmatpush.bf16.msra.mxu0 %v199
    %1699 = vmatmul.bf16.gmra.mxu0 %v1690
    %v1700 = vpop.f32.mrf.mxu0
    %v1701 = vadd.f32 0.0, %v1700
    %v1702 = vpop.f32.mrf.mxu0
    %v1703 = vadd.f32 0.0, %v1702
    %1704 = vdwg.mxu0
    %1705 = vmatpush.bf16.msra.mxu0 %v228
    %1706 = vmatpush.bf16.msra.mxu0 %v224
    %1707 = vmatpush.bf16.msra.mxu0 %v220
    %1708 = vmatpush.bf16.msra.mxu0 %v216
    %1709 = vmatpush.bf16.msra.mxu0 %v212
    %1710 = vmatpush.bf16.msra.mxu0 %v208
    %1711 = vmatpush.bf16.msra.mxu0 %v204
    %1712 = vmatpush.bf16.msra.mxu0 %v200
    %1713 = vmatmul.bf16.gmra.mxu0 %v1690
    %v1714 = vpop.f32.mrf.mxu0
    %v1715 = vadd.f32 0.0, %v1714
    %v1716 = vpop.f32.mrf.mxu0
    %v1717 = vadd.f32 0.0, %v1716
    %1718 = vdwg.mxu0
    %1719 = vmatpush.bf16.msra.mxu0 %v229
    %1720 = vmatpush.bf16.msra.mxu0 %v225
    %1721 = vmatpush.bf16.msra.mxu0 %v221
    %1722 = vmatpush.bf16.msra.mxu0 %v217
    %1723 = vmatpush.bf16.msra.mxu0 %v213
    %1724 = vmatpush.bf16.msra.mxu0 %v209
    %1725 = vmatpush.bf16.msra.mxu0 %v205
    %1726 = vmatpush.bf16.msra.mxu0 %v201
    %1727 = vmatmul.bf16.gmra.mxu0 %v1690
    %v1728 = vpop.f32.mrf.mxu0
    %v1729 = vadd.f32 0.0, %v1728
    %v1730 = vpop.f32.mrf.mxu0
    %v1731 = vadd.f32 0.0, %v1730
    %1732 = vdwg.mxu0
    %1733 = vmatpush.bf16.msra.mxu0 %v230
    %1734 = vmatpush.bf16.msra.mxu0 %v226
    %1735 = vmatpush.bf16.msra.mxu0 %v222
    %1736 = vmatpush.bf16.msra.mxu0 %v218
    %1737 = vmatpush.bf16.msra.mxu0 %v214
    %1738 = vmatpush.bf16.msra.mxu0 %v210
    %1739 = vmatpush.bf16.msra.mxu0 %v206
    %1740 = vmatpush.bf16.msra.mxu0 %v202
    %1741 = vmatmul.bf16.gmra.mxu0 %v1690
    %v1742 = vpop.f32.mrf.mxu0
    %v1743 = vadd.f32 0.0, %v1742
    %v1744 = vpop.f32.mrf.mxu0
    %v1745 = vadd.f32 0.0, %v1744
    %1746 = vdwg.mxu0
    %v1747 = vadd.f32 %v1682, %v1701
    %v1748 = vadd.f32 %v1683, %v1715
    %v1749 = vadd.f32 %v1684, %v1729
    %v1750 = vadd.f32 %v1685, %v1743
    %v1751 = vadd.f32 %v1686, %v1703
    %v1752 = vadd.f32 %v1687, %v1717
    %v1753 = vadd.f32 %v1688, %v1731
    %v1754 = vadd.f32 %v1689, %v1745
    %v1755 = vxor.u32 %v1747, 2147483648
    %v1756 = vxor.u32 %v1751, 2147483648
    %v1757 = vmul.f32 %v1755, 1.442695
    %v1758 = vpow.pop %v1757
    %v1759 = vmul.f32 %v1756, 1.442695
    %v1760 = vpow.pop %v1759
    %v1761 = vadd.f32 %v1758, 1.0
    %v1762 = vadd.f32 %v1760, 1.0
    %v1763 = vrcp.pop %v1761
    %v1764 = vmul.f32 %v1761, %v1763
    %v1765 = vsub.f32 1.0, %v1764
    %v1766 = vmul.f32 %v1763, %v1765
    %v1767 = vadd.f32 %v1763, %v1766
    %vm1768 = vweird.f32 %v1761
    %vm1769 = vweird.f32 %v1763
    %vm1770 = vmor %vm1768, %vm1769
    %v1771 = vsel %vm1770, %v1763, %v1767
    %v1772 = vand.u32 2147483647, %v1761
    %vm1773 = vcmp.eq.f32.partialorder %v1772, 8.507059e+37
    %v1774 = vand.u32 %v1761, 2147483648
    %v1775 = vor.u32 1.1754944e-38, %v1774
    %v1776 = vsel %vm1773, %v1775, %v1771
    %v1777 = vmul.f32 1.0, %v1776
    %v1778 = vrcp.pop %v1762
    %v1779 = vmul.f32 %v1762, %v1778
    %v1780 = vsub.f32 1.0, %v1779
    %v1781 = vmul.f32 %v1778, %v1780
    %v1782 = vadd.f32 %v1778, %v1781
    %vm1783 = vweird.f32 %v1762
    %vm1784 = vweird.f32 %v1778
    %vm1785 = vmor %vm1783, %vm1784
    %v1786 = vsel %vm1785, %v1778, %v1782
    %v1787 = vand.u32 2147483647, %v1762
    %vm1788 = vcmp.eq.f32.partialorder %v1787, 8.507059e+37
    %v1789 = vand.u32 %v1762, 2147483648
    %v1790 = vor.u32 1.1754944e-38, %v1789
    %v1791 = vsel %vm1788, %v1790, %v1786
    %v1792 = vmul.f32 1.0, %v1791
    %v1793 = vxor.u32 %v1748, 2147483648
    %v1794 = vxor.u32 %v1752, 2147483648
    %v1795 = vmul.f32 %v1793, 1.442695
    %v1796 = vpow.pop %v1795
    %v1797 = vmul.f32 %v1794, 1.442695
    %v1798 = vpow.pop %v1797
    %v1799 = vadd.f32 %v1796, 1.0
    %v1800 = vadd.f32 %v1798, 1.0
    %v1801 = vrcp.pop %v1799
    %v1802 = vmul.f32 %v1799, %v1801
    %v1803 = vsub.f32 1.0, %v1802
    %v1804 = vmul.f32 %v1801, %v1803
    %v1805 = vadd.f32 %v1801, %v1804
    %vm1806 = vweird.f32 %v1799
    %vm1807 = vweird.f32 %v1801
    %vm1808 = vmor %vm1806, %vm1807
    %v1809 = vsel %vm1808, %v1801, %v1805
    %v1810 = vand.u32 2147483647, %v1799
    %vm1811 = vcmp.eq.f32.partialorder %v1810, 8.507059e+37
    %v1812 = vand.u32 %v1799, 2147483648
    %v1813 = vor.u32 1.1754944e-38, %v1812
    %v1814 = vsel %vm1811, %v1813, %v1809
    %v1815 = vmul.f32 1.0, %v1814
    %v1816 = vrcp.pop %v1800
    %v1817 = vmul.f32 %v1800, %v1816
    %v1818 = vsub.f32 1.0, %v1817
    %v1819 = vmul.f32 %v1816, %v1818
    %v1820 = vadd.f32 %v1816, %v1819
    %vm1821 = vweird.f32 %v1800
    %vm1822 = vweird.f32 %v1816
    %vm1823 = vmor %vm1821, %vm1822
    %v1824 = vsel %vm1823, %v1816, %v1820
    %v1825 = vand.u32 2147483647, %v1800
    %vm1826 = vcmp.eq.f32.partialorder %v1825, 8.507059e+37
    %v1827 = vand.u32 %v1800, 2147483648
    %v1828 = vor.u32 1.1754944e-38, %v1827
    %v1829 = vsel %vm1826, %v1828, %v1824
    %v1830 = vmul.f32 1.0, %v1829
    %v1831 = vtanh.pop %v1749
    %v1832 = vtanh.pop %v1753
    %v1833 = vxor.u32 %v1750, 2147483648
    %v1834 = vxor.u32 %v1754, 2147483648
    %v1835 = vmul.f32 %v1833, 1.442695
    %v1836 = vpow.pop %v1835
    %v1837 = vmul.f32 %v1834, 1.442695
    %v1838 = vpow.pop %v1837
    %v1839 = vadd.f32 %v1836, 1.0
    %v1840 = vadd.f32 %v1838, 1.0
    %v1841 = vrcp.pop %v1839
    %v1842 = vmul.f32 %v1839, %v1841
    %v1843 = vsub.f32 1.0, %v1842
    %v1844 = vmul.f32 %v1841, %v1843
    %v1845 = vadd.f32 %v1841, %v1844
    %vm1846 = vweird.f32 %v1839
    %vm1847 = vweird.f32 %v1841
    %vm1848 = vmor %vm1846, %vm1847
    %v1849 = vsel %vm1848, %v1841, %v1845
    %v1850 = vand.u32 2147483647, %v1839
    %vm1851 = vcmp.eq.f32.partialorder %v1850, 8.507059e+37
    %v1852 = vand.u32 %v1839, 2147483648
    %v1853 = vor.u32 1.1754944e-38, %v1852
    %v1854 = vsel %vm1851, %v1853, %v1849
    %v1855 = vmul.f32 1.0, %v1854
    %v1856 = vrcp.pop %v1840
    %v1857 = vmul.f32 %v1840, %v1856
    %v1858 = vsub.f32 1.0, %v1857
    %v1859 = vmul.f32 %v1856, %v1858
    %v1860 = vadd.f32 %v1856, %v1859
    %vm1861 = vweird.f32 %v1840
    %vm1862 = vweird.f32 %v1856
    %vm1863 = vmor %vm1861, %vm1862
    %v1864 = vsel %vm1863, %v1856, %v1860
    %v1865 = vand.u32 2147483647, %v1840
    %vm1866 = vcmp.eq.f32.partialorder %v1865, 8.507059e+37
    %v1867 = vand.u32 %v1840, 2147483648
    %v1868 = vor.u32 1.1754944e-38, %v1867
    %v1869 = vsel %vm1866, %v1868, %v1864
    %v1870 = vmul.f32 1.0, %v1869
    %v1871 = vmul.f32 %v1815, %v1671
    %v1872 = vmul.f32 %v1830, %v1672
    %v1873 = vmul.f32 %v1777, %v1831
    %v1874 = vmul.f32 %v1792, %v1832
    %v1875 = vadd.f32 %v1871, %v1873
    %v1876 = vadd.f32 %v1872, %v1874
    %v1877 = vtanh.pop %v1875
    %v1878 = vtanh.pop %v1876
    %v1879 = vmul.f32 %v1855, %v1877
    %v1880 = vmul.f32 %v1870, %v1878
    %1881 = vst [vmem:[#allocation3] sm:$0xff] %v1879
    %1882 = vst [vmem:[#allocation3 + $0x8] sm:$0xff] %v1880
    %1883 = vst [vmem:[#allocation4] sm:$0xff] %v1875
    %1884 = vst [vmem:[#allocation4 + $0x8] sm:$0xff] %v1876
    // Predicated region
    $region19: #{tpu_custom_call.1} parent=1 // pred_check
      %p1885 = pneg %p29
    $region20: #{tpu_custom_call.1} parent=1 // pred_check_branch
      %1887 = sbr.rel (%p1885) target = $region22
    $region21: #{tpu_custom_call.1} parent=1 // pred_region
      %1888 = vst [vmem:[#allocation8] sm:$0xff] %v1879
      %1889 = vst [vmem:[#allocation8 + $0x8] sm:$0xff] %v1880
      %1890 = vst [vmem:[#allocation9] sm:$0xff] %v1875
      %1891 = vst [vmem:[#allocation9 + $0x8] sm:$0xff] %v1876
    $region22: #{tpu_custom_call.1} parent=1 // pred_fallthru
      _
    // Predicated region
    $region23: #{tpu_custom_call.1} parent=1 // pred_check
      _
    $region24: #{tpu_custom_call.1} parent=1 // pred_check_branch
      %1893 = sbr.rel (0) target = $region26
    $region25: #{tpu_custom_call.1} parent=1 // pred_region
      %1895 = vsyncadd [#allocation7], 0
      %s1896 = sshll.u32 [#allocation8], 4
      %s1897 = int_to_ptr.vmem [resolvable:$true] %s1896
      %s1898 = sshll.u32 %s2, 4
      %s1899 = int_to_ptr.hbm [resolvable:$true] %s1898
      %1904 = dma.vmem_to_hbm [thread:$0]  %s1897, 256, %s1899, [#allocation7], 128, 128, 8
    $region26: #{tpu_custom_call.1} parent=1 // pred_fallthru
      _
    // Predicated region
    $region27: #{tpu_custom_call.1} parent=1 // pred_check
      _
    $region28: #{tpu_custom_call.1} parent=1 // pred_check_branch
      %1906 = sbr.rel (0) target = $region30
    $region29: #{tpu_custom_call.1} parent=1 // pred_region
      %1908 = vsyncadd [#allocation10], 0
      %s1909 = sshll.u32 [#allocation9], 4
      %s1910 = int_to_ptr.vmem [resolvable:$true] %s1909
      %s1911 = sshll.u32 %s3, 4
      %s1912 = int_to_ptr.hbm [resolvable:$true] %s1911
      %1917 = dma.vmem_to_hbm [thread:$0]  %s1910, 256, %s1912, [#allocation10], 128, 128, 8
    $region30: #{tpu_custom_call.1} parent=1 // pred_fallthru
      _
    // Predicated region
    $region31: #{tpu_custom_call.1} parent=1 // pred_check
      _
    $region32: #{tpu_custom_call.1} parent=1 // pred_check_branch
      %1919 = sbr.rel (0) target = $region34
    $region33: #{tpu_custom_call.1} parent=1 // pred_region
      %1921 = dma.done [#allocation7], 256
    $region34: #{tpu_custom_call.1} parent=1 // pred_fallthru
      _
    // Predicated region
    $region35: #{tpu_custom_call.1} parent=1 // pred_check
      _
    $region36: #{tpu_custom_call.1} parent=1 // pred_check_branch
      %1923 = sbr.rel (0) target = $region38
    $region37: #{tpu_custom_call.1} parent=1 // pred_region
      %1925 = dma.done [#allocation10], 256
    $region38: #{tpu_custom_call.1} parent=1 // pred_fallthru
      _
    %1926 = vsyncpa [#allocation6], 1
    %1927 = vsyncpa [#allocation7], 1
    %1928 = vsyncpa [#allocation10], 1

</llo_original>
